<compile_context>
chip_gen: v5e
topology: v5e:2x2
jax: 0.10.0
libtpu: 0.0.40
codegen_flags: <defaults>
</compile_context>

<pallas_src>
import jax
import jax.numpy as jnp
from jax.experimental import pallas as pl
from jax.experimental.pallas import tpu as pltpu


def _round_up(n, m):
    return ((n + m - 1) // m) * m


def gru_net_kernel(x_ref,        # (T*Bp, I)    bf16  time-major, batch-padded input
                   wih_f_ref,    # (I, 3*Hp)    bf16  forward input->gates  (r|z|n blocks)
                   whh_f_ref,    # (Hp, 3*Hp)   bf16  forward hidden->gates
                   bi_f_ref,     # (1, 3*Hp)    f32   r,z: b_ih+b_hh folded; n: b_in
                   bhn_f_ref,    # (1, Hp)      f32   b_hn (gated by r)
                   wih_b_ref,    # (I, 3*Hp)    bf16  backward input->gates
                   bi_b_ref,     # (1, 3*Hp)    f32   r,z fully folded (h0 = 0); n: b_in
                   bhn_b_ref,    # (1, Hp)      f32
                   wfc_f_ref,    # (Hp, Op)     bf16  fc weight, forward half (transposed)
                   wfc_b_ref,    # (Hp, Op)     bf16  fc weight, backward half (transposed)
                   bfc_ref,      # (1, Op)      f32
                   out_ref,      # (Bp, Op)     f32
                   gi_ref):      # (T*Bp, 3*Hp) f32   VMEM scratch for precomputed x-gates
    Bp = out_ref.shape[0]
    Hp = bhn_f_ref.shape[1]
    T = x_ref.shape[0] // Bp

    # ---- Input projection for the WHOLE sequence in one matmul (off the serial path) ----
    gi_ref[...] = (
        jnp.dot(x_ref[...], wih_f_ref[...], preferred_element_type=jnp.float32)
        + bi_f_ref[...])

    # ---- Backward direction: out[:, -1, H:] is one GRU step on x_{T-1} from h0 = 0,
    #      so gh = 0 @ W_hh_b + b_hh_b, and b_hh_b is already folded into the biases.
    x_last = x_ref[pl.ds((T - 1) * Bp, Bp), :]                # (Bp, I) bf16, static slice
    gib = (jnp.dot(x_last, wih_b_ref[...], preferred_element_type=jnp.float32)
           + bi_b_ref[...])
    rb = jax.nn.sigmoid(gib[:, 0:Hp])
    zb = jax.nn.sigmoid(gib[:, Hp:2 * Hp])
    nb = jnp.tanh(gib[:, 2 * Hp:3 * Hp] + rb * bhn_b_ref[...])
    h_bwd = (1.0 - zb) * nb                                   # + zb * h0, and h0 == 0

    # Backward half of the fc + bias: independent of the recurrence, issued up front.
    acc = (jnp.dot(h_bwd.astype(jnp.bfloat16), wfc_b_ref[...],
                   preferred_element_type=jnp.float32)
           + bfc_ref[...])

    # ---- Forward recurrence: one (Bp,Hp) x (Hp,3Hp) bf16 matmul per step on the serial path.
    bhn_f = jnp.broadcast_to(bhn_f_ref[...], (Bp, Hp))        # hoisted: one broadcast total
    h = jnp.zeros((Bp, Hp), jnp.float32)                      # f32 carry
    for t in range(T):                                        # T small & static -> unrolled
        gi = gi_ref[pl.ds(t * Bp, Bp), :]                     # (Bp, 3Hp) f32, 8-row aligned
        gh = jnp.dot(h.astype(jnp.bfloat16), whh_f_ref[...],
                     preferred_element_type=jnp.float32)      # (Bp, 3Hp) f32
        r = jax.nn.sigmoid(gi[:, 0:Hp] + gh[:, 0:Hp])
        z = jax.nn.sigmoid(gi[:, Hp:2 * Hp] + gh[:, Hp:2 * Hp])
        n = jnp.tanh(gi[:, 2 * Hp:3 * Hp] + r * (gh[:, 2 * Hp:3 * Hp] + bhn_f))
        h = (1.0 - z) * n + z * h

    out_ref[...] = (acc + jnp.dot(h.astype(jnp.bfloat16), wfc_f_ref[...],
                                  preferred_element_type=jnp.float32)
                    ).astype(out_ref.dtype)


def init_params(key, in_size, hidden_size, out_size):
    """Deterministic synthetic parameters in the native torch.nn.GRU / nn.Linear layout."""
    ks = jax.random.split(key, 10)
    bound = 1.0 / jnp.sqrt(jnp.float32(hidden_size))

    def u(k, shape):
        return jax.random.uniform(k, shape, jnp.float32, -bound, bound)

    H, I, O = hidden_size, in_size, out_size
    return {
        "w_ih_f": u(ks[0], (3 * H, I)), "w_hh_f": u(ks[1], (3 * H, H)),
        "b_ih_f": u(ks[2], (3 * H,)),   "b_hh_f": u(ks[3], (3 * H,)),
        "w_ih_b": u(ks[4], (3 * H, I)), "w_hh_b": u(ks[5], (3 * H, H)),
        "b_ih_b": u(ks[6], (3 * H,)),   "b_hh_b": u(ks[7], (3 * H,)),
        "w_fc":   u(ks[8], (O, 2 * H)), "b_fc":   u(ks[9], (O,)),
    }


def prep_params(p, hidden_size, out_size):
    """Gate-stack, zero-pad to 128 lanes, fold biases, cast matmul operands to bf16."""
    H = hidden_size
    Hp = _round_up(H, 128)
    Op = _round_up(out_size, 128)

    def stack_ih(w):                        # (3H, I) -> (I, 3*Hp) bf16
        i = w.shape[1]
        g = jnp.transpose(w.reshape(3, H, i), (0, 2, 1))          # (3, I, H) = W_ig^T
        g = jnp.pad(g, ((0, 0), (0, 0), (0, Hp - H)))             # (3, I, Hp)
        return jnp.transpose(g, (1, 0, 2)).reshape(i, 3 * Hp).astype(jnp.bfloat16)

    def stack_hh(w):                        # (3H, H) -> (Hp, 3*Hp) bf16
        g = jnp.transpose(w.reshape(3, H, H), (0, 2, 1))          # (3, H, H) = W_hg^T
        g = jnp.pad(g, ((0, 0), (0, Hp - H), (0, Hp - H)))        # (3, Hp, Hp)
        return jnp.transpose(g, (1, 0, 2)).reshape(Hp, 3 * Hp).astype(jnp.bfloat16)

    def pad_h(v):                           # (H,) -> (Hp,)
        return jnp.pad(v, (0, Hp - H))

    def fold_bias(b_ih, b_hh):              # -> (1, 3*Hp) f32 : r,z folded; n = b_in only
        br = pad_h(b_ih[0:H] + b_hh[0:H])
        bz = pad_h(b_ih[H:2 * H] + b_hh[H:2 * H])
        bn = pad_h(b_ih[2 * H:3 * H])
        return jnp.concatenate([br, bz, bn]).reshape(1, 3 * Hp)

    def pad_fc(w):                          # (H, O) -> (Hp, Op) bf16
        return jnp.pad(w, ((0, Hp - H), (0, Op - out_size))).astype(jnp.bfloat16)

    return {
        "wih_f": stack_ih(p["w_ih_f"]),
        "whh_f": stack_hh(p["w_hh_f"]),
        "bi_f":  fold_bias(p["b_ih_f"], p["b_hh_f"]),
        "bhn_f": pad_h(p["b_hh_f"][2 * H:3 * H]).reshape(1, Hp),
        "wih_b": stack_ih(p["w_ih_b"]),
        # w_hh_b is not needed: the backward state used by fc is a single step from h0 = 0,
        # so h0 @ W_hh_b == 0 and b_hh_b is folded into bi_b / bhn_b below.
        "bi_b":  fold_bias(p["b_ih_b"], p["b_hh_b"]),
        "bhn_b": pad_h(p["b_hh_b"][2 * H:3 * H]).reshape(1, Hp),
        "wfc_f": pad_fc(p["w_fc"][:, 0:H].T),
        "wfc_b": pad_fc(p["w_fc"][:, H:2 * H].T),
        "bfc":   jnp.pad(p["b_fc"], (0, Op - out_size)).reshape(1, Op),
        "Hp": Hp, "Op": Op,
    }


def gru_net_forward(x, prepped, out_size):
    """x: (B, T, I) float32, batch-first like PyTorch. Returns (B, out_size) float32."""
    B, T, I = x.shape
    Hp, Op = prepped["Hp"], prepped["Op"]
    Bp = _round_up(B, 8)                                     # fill the f32 sublane group

    # Pad batch, go time-major, flatten to (T*Bp, I), cast matmul operands to bf16.
    x_p = jnp.pad(x, ((0, Bp - B), (0, 0), (0, 0)))          # (Bp, T, I)
    x_tm = jnp.transpose(x_p, (1, 0, 2)).reshape(T * Bp, I).astype(jnp.bfloat16)

    vmem = pl.BlockSpec(memory_space=pltpu.MemorySpace.VMEM)
    out_p = pl.pallas_call(
        gru_net_kernel,
        out_shape=jax.ShapeDtypeStruct((Bp, Op), jnp.float32),
        in_specs=[vmem] * 11,
        out_specs=vmem,
        scratch_shapes=[pltpu.VMEM((T * Bp, 3 * Hp), jnp.float32)],
        # Total residency ~300 KiB: trivially fits VMEM on v5e/v6e/v7x, no grid needed.
        # TODO(synk): for large batches, add a batch grid axis marked "parallel" so the
        # second TensorCore on v7x is used, and size tiles for its 64 MiB VMEM.
    )(x_tm,
      prepped["wih_f"], prepped["whh_f"], prepped["bi_f"], prepped["bhn_f"],
      prepped["wih_b"], prepped["bi_b"], prepped["bhn_b"],
      prepped["wfc_f"], prepped["wfc_b"], prepped["bfc"])
    return out_p[:B, :out_size]


def gru_net_reference(x, p, hidden_size):
    """Pure-JAX f32 reference mirroring torch.nn.GRU(bidirectional) + Linear on out[:, -1]."""
    H = hidden_size
    B, T, _ = x.shape
    x_tm = jnp.transpose(x, (1, 0, 2))                       # (T, B, I)

    def step(h, xt, w_ih, w_hh, b_ih, b_hh):
        gi = xt @ w_ih.T + b_ih
        gh = h @ w_hh.T + b_hh
        r = jax.nn.sigmoid(gi[:, 0:H] + gh[:, 0:H])
        z = jax.nn.sigmoid(gi[:, H:2 * H] + gh[:, H:2 * H])
        n = jnp.tanh(gi[:, 2 * H:3 * H] + r * gh[:, 2 * H:3 * H])
        return (1.0 - z) * n + z * h

    h_f = jnp.zeros((B, H), jnp.float32)
    for t in range(T):                                       # forward dir: last hidden state
        h_f = step(h_f, x_tm[t], p["w_ih_f"], p["w_hh_f"], p["b_ih_f"], p["b_hh_f"])
    # backward dir at output index T-1 == its first step (processes x_{T-1} from h0 = 0)
    h_b = step(jnp.zeros((B, H), jnp.float32), x_tm[T - 1],
               p["w_ih_b"], p["w_hh_b"], p["b_ih_b"], p["b_hh_b"])
    last = jnp.concatenate([h_f, h_b], axis=-1)              # out[:, -1, :]  (B, 2H)
    return last @ p["w_fc"].T + p["b_fc"]


if __name__ == "__main__":
    key = jax.random.PRNGKey(0)
    k_param, k_x = jax.random.split(key)

    # batch, seq, in_size, hidden_size, out_size (= len(LABELS))
    B, T, I, H, O = 2, 8, 16, 32, 8
    raw = init_params(k_param, I, H, O)
    prepped = prep_params(raw, H, O)
    x = jax.random.normal(k_x, (B, T, I), jnp.float32)

    out = gru_net_forward(x, prepped, O)
    out = jax.block_until_ready(out)
    assert out.shape == (B, O)
    assert bool(jnp.all(jnp.isfinite(out)))

    # Correctness vs. pure-JAX f32 reference (kernel uses bf16 MXU operands -> loose tol).
    ref = gru_net_reference(x, raw, H)
    max_err = float(jnp.max(jnp.abs(out - ref)))
    assert max_err < 5e-2, f"max abs error vs reference too large: {max_err}"

    print("KERNEL_OK")
</pallas_src>

<mosaic_0001>
module attributes {stable_mosaic.version = 11 : i64} {
  func.func @gru_net_kernel(%arg0: memref<64x16xbf16, #tpu.memory_space<vmem>>, %arg1: memref<16x384xbf16, #tpu.memory_space<vmem>>, %arg2: memref<128x384xbf16, #tpu.memory_space<vmem>>, %arg3: memref<1x384xf32, #tpu.memory_space<vmem>>, %arg4: memref<1x128xf32, #tpu.memory_space<vmem>>, %arg5: memref<16x384xbf16, #tpu.memory_space<vmem>>, %arg6: memref<1x384xf32, #tpu.memory_space<vmem>>, %arg7: memref<1x128xf32, #tpu.memory_space<vmem>>, %arg8: memref<128x128xbf16, #tpu.memory_space<vmem>>, %arg9: memref<128x128xbf16, #tpu.memory_space<vmem>>, %arg10: memref<1x128xf32, #tpu.memory_space<vmem>>, %arg11: memref<8x128xf32, #tpu.memory_space<vmem>>, %arg12: memref<64x384xf32, #tpu.memory_space<vmem>>) attributes {dimension_semantics = [], scalar_prefetch = 0 : i64, scratch_operands = 1 : i64, tpu.core_type = #tpu.core_type<tc>} {
    %c0 = arith.constant 0 : index
    %c0_0 = arith.constant 0 : index
    %0 = vector.load %arg0[%c0, %c0_0] : memref<64x16xbf16, #tpu.memory_space<vmem>>, vector<64x16xbf16>
    %c0_1 = arith.constant 0 : index
    %c0_2 = arith.constant 0 : index
    %1 = vector.load %arg1[%c0_1, %c0_2] : memref<16x384xbf16, #tpu.memory_space<vmem>>, vector<16x384xbf16>
    %cst = arith.constant dense<0.000000e+00> : vector<64x384xf32>
    %2 = tpu.matmul %0, %1, %cst {dimension_numbers = #tpu.dot_dimension_numbers<[1], [0], [0], [1], [0, 0, 1, 1], [], []>} : vector<64x16xbf16>, vector<16x384xbf16>, vector<64x384xf32> -> vector<64x384xf32>
    %c0_3 = arith.constant 0 : index
    %c0_4 = arith.constant 0 : index
    %3 = vector.load %arg3[%c0_3, %c0_4] : memref<1x384xf32, #tpu.memory_space<vmem>>, vector<1x384xf32>
    %4 = vector.broadcast %3 : vector<1x384xf32> to vector<64x384xf32>
    %5 = arith.addf %2, %4 : vector<64x384xf32>
    %c0_5 = arith.constant 0 : index
    %c0_6 = arith.constant 0 : index
    %6 = vector.load %arg12[%c0_5, %c0_6] : memref<64x384xf32, #tpu.memory_space<vmem>>, vector<64x384xf32>
    tpu.vector_store %arg12[%c0_5, %c0_6], %5 {strides = array<i32>} : memref<64x384xf32, #tpu.memory_space<vmem>>, vector<64x384xf32>,
    %c56 = arith.constant 56 : index
    %c0_7 = arith.constant 0 : index
    %7 = vector.load %arg0[%c56, %c0_7] : memref<64x16xbf16, #tpu.memory_space<vmem>>, vector<8x16xbf16>
    %c0_8 = arith.constant 0 : index
    %c0_9 = arith.constant 0 : index
    %8 = vector.load %arg5[%c0_8, %c0_9] : memref<16x384xbf16, #tpu.memory_space<vmem>>, vector<16x384xbf16>
    %cst_10 = arith.constant dense<0.000000e+00> : vector<8x384xf32>
    %9 = tpu.matmul %7, %8, %cst_10 {dimension_numbers = #tpu.dot_dimension_numbers<[1], [0], [0], [1], [0, 0, 1, 1], [], []>} : vector<8x16xbf16>, vector<16x384xbf16>, vector<8x384xf32> -> vector<8x384xf32>
    %c0_11 = arith.constant 0 : index
    %c0_12 = arith.constant 0 : index
    %10 = vector.load %arg6[%c0_11, %c0_12] : memref<1x384xf32, #tpu.memory_space<vmem>>, vector<1x384xf32>
    %11 = vector.broadcast %10 : vector<1x384xf32> to vector<8x384xf32>
    %12 = arith.addf %9, %11 : vector<8x384xf32>
    %13 = vector.extract_strided_slice %12 {offsets = [0, 0], sizes = [8, 128], strides = [1, 1]} : vector<8x384xf32> to vector<8x128xf32>
    %14 = arith.negf %13 : vector<8x128xf32>
    %15 = math.exp %14 : vector<8x128xf32>
    %cst_13 = arith.constant 1.000000e+00 : f32
    %16 = vector.broadcast %cst_13 : f32 to vector<8x128xf32>
    %17 = arith.addf %16, %15 : vector<8x128xf32>
    %18 = arith.divf %16, %17 : vector<8x128xf32>
    %19 = vector.extract_strided_slice %12 {offsets = [0, 128], sizes = [8, 128], strides = [1, 1]} : vector<8x384xf32> to vector<8x128xf32>
    %20 = arith.negf %19 : vector<8x128xf32>
    %21 = math.exp %20 : vector<8x128xf32>
    %cst_14 = arith.constant 1.000000e+00 : f32
    %22 = vector.broadcast %cst_14 : f32 to vector<8x128xf32>
    %23 = arith.addf %22, %21 : vector<8x128xf32>
    %24 = arith.divf %22, %23 : vector<8x128xf32>
    %25 = vector.extract_strided_slice %12 {offsets = [0, 256], sizes = [8, 128], strides = [1, 1]} : vector<8x384xf32> to vector<8x128xf32>
    %c0_15 = arith.constant 0 : index
    %c0_16 = arith.constant 0 : index
    %26 = vector.load %arg7[%c0_15, %c0_16] : memref<1x128xf32, #tpu.memory_space<vmem>>, vector<1x128xf32>
    %27 = vector.broadcast %26 : vector<1x128xf32> to vector<8x128xf32>
    %28 = arith.mulf %18, %27 : vector<8x128xf32>
    %29 = arith.addf %25, %28 : vector<8x128xf32>
    %30 = math.tanh %29 : vector<8x128xf32>
    %cst_17 = arith.constant 1.000000e+00 : f32
    %31 = vector.broadcast %cst_17 : f32 to vector<8x128xf32>
    %32 = arith.subf %31, %24 : vector<8x128xf32>
    %33 = arith.mulf %32, %30 : vector<8x128xf32>
    %34 = arith.truncf %33 : vector<8x128xf32> to vector<8x128xbf16>
    %c0_18 = arith.constant 0 : index
    %c0_19 = arith.constant 0 : index
    %35 = vector.load %arg9[%c0_18, %c0_19] : memref<128x128xbf16, #tpu.memory_space<vmem>>, vector<128x128xbf16>
    %cst_20 = arith.constant dense<0.000000e+00> : vector<8x128xf32>
    %36 = tpu.matmul %34, %35, %cst_20 {dimension_numbers = #tpu.dot_dimension_numbers<[1], [0], [0], [1], [0, 0, 1, 1], [], []>} : vector<8x128xbf16>, vector<128x128xbf16>, vector<8x128xf32> -> vector<8x128xf32>
    %c0_21 = arith.constant 0 : index
    %c0_22 = arith.constant 0 : index
    %37 = vector.load %arg10[%c0_21, %c0_22] : memref<1x128xf32, #tpu.memory_space<vmem>>, vector<1x128xf32>
    %38 = vector.broadcast %37 : vector<1x128xf32> to vector<8x128xf32>
    %39 = arith.addf %36, %38 : vector<8x128xf32>
    %c0_23 = arith.constant 0 : index
    %c0_24 = arith.constant 0 : index
    %40 = vector.load %arg4[%c0_23, %c0_24] : memref<1x128xf32, #tpu.memory_space<vmem>>, vector<1x128xf32>
    %41 = vector.shape_cast %40 : vector<1x128xf32> to vector<1x128xf32>
    %42 = vector.broadcast %41 : vector<1x128xf32> to vector<8x128xf32>
    %cst_25 = arith.constant 0.000000e+00 : f32
    %43 = vector.broadcast %cst_25 : f32 to vector<8x128xf32>
    %c0_26 = arith.constant 0 : index
    %c0_27 = arith.constant 0 : index
    %44 = vector.load %arg12[%c0_26, %c0_27] : memref<64x384xf32, #tpu.memory_space<vmem>>, vector<8x384xf32>
    %45 = arith.truncf %43 : vector<8x128xf32> to vector<8x128xbf16>
    %c0_28 = arith.constant 0 : index
    %c0_29 = arith.constant 0 : index
    %46 = vector.load %arg2[%c0_28, %c0_29] : memref<128x384xbf16, #tpu.memory_space<vmem>>, vector<128x384xbf16>
    %cst_30 = arith.constant dense<0.000000e+00> : vector<8x384xf32>
    %47 = tpu.matmul %45, %46, %cst_30 {dimension_numbers = #tpu.dot_dimension_numbers<[1], [0], [0], [1], [0, 0, 1, 1], [], []>} : vector<8x128xbf16>, vector<128x384xbf16>, vector<8x384xf32> -> vector<8x384xf32>
    %48 = vector.extract_strided_slice %44 {offsets = [0, 0], sizes = [8, 128], strides = [1, 1]} : vector<8x384xf32> to vector<8x128xf32>
    %49 = vector.extract_strided_slice %47 {offsets = [0, 0], sizes = [8, 128], strides = [1, 1]} : vector<8x384xf32> to vector<8x128xf32>
    %50 = arith.addf %48, %49 : vector<8x128xf32>
    %51 = arith.negf %50 : vector<8x128xf32>
    %52 = math.exp %51 : vector<8x128xf32>
    %cst_31 = arith.constant 1.000000e+00 : f32
    %53 = vector.broadcast %cst_31 : f32 to vector<8x128xf32>
    %54 = arith.addf %53, %52 : vector<8x128xf32>
    %55 = arith.divf %53, %54 : vector<8x128xf32>
    %56 = vector.extract_strided_slice %44 {offsets = [0, 128], sizes = [8, 128], strides = [1, 1]} : vector<8x384xf32> to vector<8x128xf32>
    %57 = vector.extract_strided_slice %47 {offsets = [0, 128], sizes = [8, 128], strides = [1, 1]} : vector<8x384xf32> to vector<8x128xf32>
    %58 = arith.addf %56, %57 : vector<8x128xf32>
    %59 = arith.negf %58 : vector<8x128xf32>
    %60 = math.exp %59 : vector<8x128xf32>
    %cst_32 = arith.constant 1.000000e+00 : f32
    %61 = vector.broadcast %cst_32 : f32 to vector<8x128xf32>
    %62 = arith.addf %61, %60 : vector<8x128xf32>
    %63 = arith.divf %61, %62 : vector<8x128xf32>
    %64 = vector.extract_strided_slice %44 {offsets = [0, 256], sizes = [8, 128], strides = [1, 1]} : vector<8x384xf32> to vector<8x128xf32>
    %65 = vector.extract_strided_slice %47 {offsets = [0, 256], sizes = [8, 128], strides = [1, 1]} : vector<8x384xf32> to vector<8x128xf32>
    %66 = arith.addf %65, %42 : vector<8x128xf32>
    %67 = arith.mulf %55, %66 : vector<8x128xf32>
    %68 = arith.addf %64, %67 : vector<8x128xf32>
    %69 = math.tanh %68 : vector<8x128xf32>
    %cst_33 = arith.constant 1.000000e+00 : f32
    %70 = vector.broadcast %cst_33 : f32 to vector<8x128xf32>
    %71 = arith.subf %70, %63 : vector<8x128xf32>
    %72 = arith.mulf %71, %69 : vector<8x128xf32>
    %73 = arith.mulf %63, %43 : vector<8x128xf32>
    %74 = arith.addf %72, %73 : vector<8x128xf32>
    %c8 = arith.constant 8 : index
    %c0_34 = arith.constant 0 : index
    %75 = vector.load %arg12[%c8, %c0_34] : memref<64x384xf32, #tpu.memory_space<vmem>>, vector<8x384xf32>
    %76 = arith.truncf %74 : vector<8x128xf32> to vector<8x128xbf16>
    %c0_35 = arith.constant 0 : index
    %c0_36 = arith.constant 0 : index
    %77 = vector.load %arg2[%c0_35, %c0_36] : memref<128x384xbf16, #tpu.memory_space<vmem>>, vector<128x384xbf16>
    %cst_37 = arith.constant dense<0.000000e+00> : vector<8x384xf32>
    %78 = tpu.matmul %76, %77, %cst_37 {dimension_numbers = #tpu.dot_dimension_numbers<[1], [0], [0], [1], [0, 0, 1, 1], [], []>} : vector<8x128xbf16>, vector<128x384xbf16>, vector<8x384xf32> -> vector<8x384xf32>
    %79 = vector.extract_strided_slice %75 {offsets = [0, 0], sizes = [8, 128], strides = [1, 1]} : vector<8x384xf32> to vector<8x128xf32>
    %80 = vector.extract_strided_slice %78 {offsets = [0, 0], sizes = [8, 128], strides = [1, 1]} : vector<8x384xf32> to vector<8x128xf32>
    %81 = arith.addf %79, %80 : vector<8x128xf32>
    %82 = arith.negf %81 : vector<8x128xf32>
    %83 = math.exp %82 : vector<8x128xf32>
    %cst_38 = arith.constant 1.000000e+00 : f32
    %84 = vector.broadcast %cst_38 : f32 to vector<8x128xf32>
    %85 = arith.addf %84, %83 : vector<8x128xf32>
    %86 = arith.divf %84, %85 : vector<8x128xf32>
    %87 = vector.extract_strided_slice %75 {offsets = [0, 128], sizes = [8, 128], strides = [1, 1]} : vector<8x384xf32> to vector<8x128xf32>
    %88 = vector.extract_strided_slice %78 {offsets = [0, 128], sizes = [8, 128], strides = [1, 1]} : vector<8x384xf32> to vector<8x128xf32>
    %89 = arith.addf %87, %88 : vector<8x128xf32>
    %90 = arith.negf %89 : vector<8x128xf32>
    %91 = math.exp %90 : vector<8x128xf32>
    %cst_39 = arith.constant 1.000000e+00 : f32
    %92 = vector.broadcast %cst_39 : f32 to vector<8x128xf32>
    %93 = arith.addf %92, %91 : vector<8x128xf32>
    %94 = arith.divf %92, %93 : vector<8x128xf32>
    %95 = vector.extract_strided_slice %75 {offsets = [0, 256], sizes = [8, 128], strides = [1, 1]} : vector<8x384xf32> to vector<8x128xf32>
    %96 = vector.extract_strided_slice %78 {offsets = [0, 256], sizes = [8, 128], strides = [1, 1]} : vector<8x384xf32> to vector<8x128xf32>
    %97 = arith.addf %96, %42 : vector<8x128xf32>
    %98 = arith.mulf %86, %97 : vector<8x128xf32>
    %99 = arith.addf %95, %98 : vector<8x128xf32>
    %100 = math.tanh %99 : vector<8x128xf32>
    %cst_40 = arith.constant 1.000000e+00 : f32
    %101 = vector.broadcast %cst_40 : f32 to vector<8x128xf32>
    %102 = arith.subf %101, %94 : vector<8x128xf32>
    %103 = arith.mulf %102, %100 : vector<8x128xf32>
    %104 = arith.mulf %94, %74 : vector<8x128xf32>
    %105 = arith.addf %103, %104 : vector<8x128xf32>
    %c16 = arith.constant 16 : index
    %c0_41 = arith.constant 0 : index
    %106 = vector.load %arg12[%c16, %c0_41] : memref<64x384xf32, #tpu.memory_space<vmem>>, vector<8x384xf32>
    %107 = arith.truncf %105 : vector<8x128xf32> to vector<8x128xbf16>
    %c0_42 = arith.constant 0 : index
    %c0_43 = arith.constant 0 : index
    %108 = vector.load %arg2[%c0_42, %c0_43] : memref<128x384xbf16, #tpu.memory_space<vmem>>, vector<128x384xbf16>
    %cst_44 = arith.constant dense<0.000000e+00> : vector<8x384xf32>
    %109 = tpu.matmul %107, %108, %cst_44 {dimension_numbers = #tpu.dot_dimension_numbers<[1], [0], [0], [1], [0, 0, 1, 1], [], []>} : vector<8x128xbf16>, vector<128x384xbf16>, vector<8x384xf32> -> vector<8x384xf32>
    %110 = vector.extract_strided_slice %106 {offsets = [0, 0], sizes = [8, 128], strides = [1, 1]} : vector<8x384xf32> to vector<8x128xf32>
    %111 = vector.extract_strided_slice %109 {offsets = [0, 0], sizes = [8, 128], strides = [1, 1]} : vector<8x384xf32> to vector<8x128xf32>
    %112 = arith.addf %110, %111 : vector<8x128xf32>
    %113 = arith.negf %112 : vector<8x128xf32>
    %114 = math.exp %113 : vector<8x128xf32>
    %cst_45 = arith.constant 1.000000e+00 : f32
    %115 = vector.broadcast %cst_45 : f32 to vector<8x128xf32>
    %116 = arith.addf %115, %114 : vector<8x128xf32>
    %117 = arith.divf %115, %116 : vector<8x128xf32>
    %118 = vector.extract_strided_slice %106 {offsets = [0, 128], sizes = [8, 128], strides = [1, 1]} : vector<8x384xf32> to vector<8x128xf32>
    %119 = vector.extract_strided_slice %109 {offsets = [0, 128], sizes = [8, 128], strides = [1, 1]} : vector<8x384xf32> to vector<8x128xf32>
    %120 = arith.addf %118, %119 : vector<8x128xf32>
    %121 = arith.negf %120 : vector<8x128xf32>
    %122 = math.exp %121 : vector<8x128xf32>
    %cst_46 = arith.constant 1.000000e+00 : f32
    %123 = vector.broadcast %cst_46 : f32 to vector<8x128xf32>
    %124 = arith.addf %123, %122 : vector<8x128xf32>
    %125 = arith.divf %123, %124 : vector<8x128xf32>
    %126 = vector.extract_strided_slice %106 {offsets = [0, 256], sizes = [8, 128], strides = [1, 1]} : vector<8x384xf32> to vector<8x128xf32>
    %127 = vector.extract_strided_slice %109 {offsets = [0, 256], sizes = [8, 128], strides = [1, 1]} : vector<8x384xf32> to vector<8x128xf32>
    %128 = arith.addf %127, %42 : vector<8x128xf32>
    %129 = arith.mulf %117, %128 : vector<8x128xf32>
    %130 = arith.addf %126, %129 : vector<8x128xf32>
    %131 = math.tanh %130 : vector<8x128xf32>
    %cst_47 = arith.constant 1.000000e+00 : f32
    %132 = vector.broadcast %cst_47 : f32 to vector<8x128xf32>
    %133 = arith.subf %132, %125 : vector<8x128xf32>
    %134 = arith.mulf %133, %131 : vector<8x128xf32>
    %135 = arith.mulf %125, %105 : vector<8x128xf32>
    %136 = arith.addf %134, %135 : vector<8x128xf32>
    %c24 = arith.constant 24 : index
    %c0_48 = arith.constant 0 : index
    %137 = vector.load %arg12[%c24, %c0_48] : memref<64x384xf32, #tpu.memory_space<vmem>>, vector<8x384xf32>
    %138 = arith.truncf %136 : vector<8x128xf32> to vector<8x128xbf16>
    %c0_49 = arith.constant 0 : index
    %c0_50 = arith.constant 0 : index
    %139 = vector.load %arg2[%c0_49, %c0_50] : memref<128x384xbf16, #tpu.memory_space<vmem>>, vector<128x384xbf16>
    %cst_51 = arith.constant dense<0.000000e+00> : vector<8x384xf32>
    %140 = tpu.matmul %138, %139, %cst_51 {dimension_numbers = #tpu.dot_dimension_numbers<[1], [0], [0], [1], [0, 0, 1, 1], [], []>} : vector<8x128xbf16>, vector<128x384xbf16>, vector<8x384xf32> -> vector<8x384xf32>
    %141 = vector.extract_strided_slice %137 {offsets = [0, 0], sizes = [8, 128], strides = [1, 1]} : vector<8x384xf32> to vector<8x128xf32>
    %142 = vector.extract_strided_slice %140 {offsets = [0, 0], sizes = [8, 128], strides = [1, 1]} : vector<8x384xf32> to vector<8x128xf32>
    %143 = arith.addf %141, %142 : vector<8x128xf32>
    %144 = arith.negf %143 : vector<8x128xf32>
    %145 = math.exp %144 : vector<8x128xf32>
    %cst_52 = arith.constant 1.000000e+00 : f32
    %146 = vector.broadcast %cst_52 : f32 to vector<8x128xf32>
    %147 = arith.addf %146, %145 : vector<8x128xf32>
    %148 = arith.divf %146, %147 : vector<8x128xf32>
    %149 = vector.extract_strided_slice %137 {offsets = [0, 128], sizes = [8, 128], strides = [1, 1]} : vector<8x384xf32> to vector<8x128xf32>
    %150 = vector.extract_strided_slice %140 {offsets = [0, 128], sizes = [8, 128], strides = [1, 1]} : vector<8x384xf32> to vector<8x128xf32>
    %151 = arith.addf %149, %150 : vector<8x128xf32>
    %152 = arith.negf %151 : vector<8x128xf32>
    %153 = math.exp %152 : vector<8x128xf32>
    %cst_53 = arith.constant 1.000000e+00 : f32
    %154 = vector.broadcast %cst_53 : f32 to vector<8x128xf32>
    %155 = arith.addf %154, %153 : vector<8x128xf32>
    %156 = arith.divf %154, %155 : vector<8x128xf32>
    %157 = vector.extract_strided_slice %137 {offsets = [0, 256], sizes = [8, 128], strides = [1, 1]} : vector<8x384xf32> to vector<8x128xf32>
    %158 = vector.extract_strided_slice %140 {offsets = [0, 256], sizes = [8, 128], strides = [1, 1]} : vector<8x384xf32> to vector<8x128xf32>
    %159 = arith.addf %158, %42 : vector<8x128xf32>
    %160 = arith.mulf %148, %159 : vector<8x128xf32>
    %161 = arith.addf %157, %160 : vector<8x128xf32>
    %162 = math.tanh %161 : vector<8x128xf32>
    %cst_54 = arith.constant 1.000000e+00 : f32
    %163 = vector.broadcast %cst_54 : f32 to vector<8x128xf32>
    %164 = arith.subf %163, %156 : vector<8x128xf32>
    %165 = arith.mulf %164, %162 : vector<8x128xf32>
    %166 = arith.mulf %156, %136 : vector<8x128xf32>
    %167 = arith.addf %165, %166 : vector<8x128xf32>
    %c32 = arith.constant 32 : index
    %c0_55 = arith.constant 0 : index
    %168 = vector.load %arg12[%c32, %c0_55] : memref<64x384xf32, #tpu.memory_space<vmem>>, vector<8x384xf32>
    %169 = arith.truncf %167 : vector<8x128xf32> to vector<8x128xbf16>
    %c0_56 = arith.constant 0 : index
    %c0_57 = arith.constant 0 : index
    %170 = vector.load %arg2[%c0_56, %c0_57] : memref<128x384xbf16, #tpu.memory_space<vmem>>, vector<128x384xbf16>
    %cst_58 = arith.constant dense<0.000000e+00> : vector<8x384xf32>
    %171 = tpu.matmul %169, %170, %cst_58 {dimension_numbers = #tpu.dot_dimension_numbers<[1], [0], [0], [1], [0, 0, 1, 1], [], []>} : vector<8x128xbf16>, vector<128x384xbf16>, vector<8x384xf32> -> vector<8x384xf32>
    %172 = vector.extract_strided_slice %168 {offsets = [0, 0], sizes = [8, 128], strides = [1, 1]} : vector<8x384xf32> to vector<8x128xf32>
    %173 = vector.extract_strided_slice %171 {offsets = [0, 0], sizes = [8, 128], strides = [1, 1]} : vector<8x384xf32> to vector<8x128xf32>
    %174 = arith.addf %172, %173 : vector<8x128xf32>
    %175 = arith.negf %174 : vector<8x128xf32>
    %176 = math.exp %175 : vector<8x128xf32>
    %cst_59 = arith.constant 1.000000e+00 : f32
    %177 = vector.broadcast %cst_59 : f32 to vector<8x128xf32>
    %178 = arith.addf %177, %176 : vector<8x128xf32>
    %179 = arith.divf %177, %178 : vector<8x128xf32>
    %180 = vector.extract_strided_slice %168 {offsets = [0, 128], sizes = [8, 128], strides = [1, 1]} : vector<8x384xf32> to vector<8x128xf32>
    %181 = vector.extract_strided_slice %171 {offsets = [0, 128], sizes = [8, 128], strides = [1, 1]} : vector<8x384xf32> to vector<8x128xf32>
    %182 = arith.addf %180, %181 : vector<8x128xf32>
    %183 = arith.negf %182 : vector<8x128xf32>
    %184 = math.exp %183 : vector<8x128xf32>
    %cst_60 = arith.constant 1.000000e+00 : f32
    %185 = vector.broadcast %cst_60 : f32 to vector<8x128xf32>
    %186 = arith.addf %185, %184 : vector<8x128xf32>
    %187 = arith.divf %185, %186 : vector<8x128xf32>
    %188 = vector.extract_strided_slice %168 {offsets = [0, 256], sizes = [8, 128], strides = [1, 1]} : vector<8x384xf32> to vector<8x128xf32>
    %189 = vector.extract_strided_slice %171 {offsets = [0, 256], sizes = [8, 128], strides = [1, 1]} : vector<8x384xf32> to vector<8x128xf32>
    %190 = arith.addf %189, %42 : vector<8x128xf32>
    %191 = arith.mulf %179, %190 : vector<8x128xf32>
    %192 = arith.addf %188, %191 : vector<8x128xf32>
    %193 = math.tanh %192 : vector<8x128xf32>
    %cst_61 = arith.constant 1.000000e+00 : f32
    %194 = vector.broadcast %cst_61 : f32 to vector<8x128xf32>
    %195 = arith.subf %194, %187 : vector<8x128xf32>
    %196 = arith.mulf %195, %193 : vector<8x128xf32>
    %197 = arith.mulf %187, %167 : vector<8x128xf32>
    %198 = arith.addf %196, %197 : vector<8x128xf32>
    %c40 = arith.constant 40 : index
    %c0_62 = arith.constant 0 : index
    %199 = vector.load %arg12[%c40, %c0_62] : memref<64x384xf32, #tpu.memory_space<vmem>>, vector<8x384xf32>
    %200 = arith.truncf %198 : vector<8x128xf32> to vector<8x128xbf16>
    %c0_63 = arith.constant 0 : index
    %c0_64 = arith.constant 0 : index
    %201 = vector.load %arg2[%c0_63, %c0_64] : memref<128x384xbf16, #tpu.memory_space<vmem>>, vector<128x384xbf16>
    %cst_65 = arith.constant dense<0.000000e+00> : vector<8x384xf32>
    %202 = tpu.matmul %200, %201, %cst_65 {dimension_numbers = #tpu.dot_dimension_numbers<[1], [0], [0], [1], [0, 0, 1, 1], [], []>} : vector<8x128xbf16>, vector<128x384xbf16>, vector<8x384xf32> -> vector<8x384xf32>
    %203 = vector.extract_strided_slice %199 {offsets = [0, 0], sizes = [8, 128], strides = [1, 1]} : vector<8x384xf32> to vector<8x128xf32>
    %204 = vector.extract_strided_slice %202 {offsets = [0, 0], sizes = [8, 128], strides = [1, 1]} : vector<8x384xf32> to vector<8x128xf32>
    %205 = arith.addf %203, %204 : vector<8x128xf32>
    %206 = arith.negf %205 : vector<8x128xf32>
    %207 = math.exp %206 : vector<8x128xf32>
    %cst_66 = arith.constant 1.000000e+00 : f32
    %208 = vector.broadcast %cst_66 : f32 to vector<8x128xf32>
    %209 = arith.addf %208, %207 : vector<8x128xf32>
    %210 = arith.divf %208, %209 : vector<8x128xf32>
    %211 = vector.extract_strided_slice %199 {offsets = [0, 128], sizes = [8, 128], strides = [1, 1]} : vector<8x384xf32> to vector<8x128xf32>
    %212 = vector.extract_strided_slice %202 {offsets = [0, 128], sizes = [8, 128], strides = [1, 1]} : vector<8x384xf32> to vector<8x128xf32>
    %213 = arith.addf %211, %212 : vector<8x128xf32>
    %214 = arith.negf %213 : vector<8x128xf32>
    %215 = math.exp %214 : vector<8x128xf32>
    %cst_67 = arith.constant 1.000000e+00 : f32
    %216 = vector.broadcast %cst_67 : f32 to vector<8x128xf32>
    %217 = arith.addf %216, %215 : vector<8x128xf32>
    %218 = arith.divf %216, %217 : vector<8x128xf32>
    %219 = vector.extract_strided_slice %199 {offsets = [0, 256], sizes = [8, 128], strides = [1, 1]} : vector<8x384xf32> to vector<8x128xf32>
    %220 = vector.extract_strided_slice %202 {offsets = [0, 256], sizes = [8, 128], strides = [1, 1]} : vector<8x384xf32> to vector<8x128xf32>
    %221 = arith.addf %220, %42 : vector<8x128xf32>
    %222 = arith.mulf %210, %221 : vector<8x128xf32>
    %223 = arith.addf %219, %222 : vector<8x128xf32>
    %224 = math.tanh %223 : vector<8x128xf32>
    %cst_68 = arith.constant 1.000000e+00 : f32
    %225 = vector.broadcast %cst_68 : f32 to vector<8x128xf32>
    %226 = arith.subf %225, %218 : vector<8x128xf32>
    %227 = arith.mulf %226, %224 : vector<8x128xf32>
    %228 = arith.mulf %218, %198 : vector<8x128xf32>
    %229 = arith.addf %227, %228 : vector<8x128xf32>
    %c48 = arith.constant 48 : index
    %c0_69 = arith.constant 0 : index
    %230 = vector.load %arg12[%c48, %c0_69] : memref<64x384xf32, #tpu.memory_space<vmem>>, vector<8x384xf32>
    %231 = arith.truncf %229 : vector<8x128xf32> to vector<8x128xbf16>
    %c0_70 = arith.constant 0 : index
    %c0_71 = arith.constant 0 : index
    %232 = vector.load %arg2[%c0_70, %c0_71] : memref<128x384xbf16, #tpu.memory_space<vmem>>, vector<128x384xbf16>
    %cst_72 = arith.constant dense<0.000000e+00> : vector<8x384xf32>
    %233 = tpu.matmul %231, %232, %cst_72 {dimension_numbers = #tpu.dot_dimension_numbers<[1], [0], [0], [1], [0, 0, 1, 1], [], []>} : vector<8x128xbf16>, vector<128x384xbf16>, vector<8x384xf32> -> vector<8x384xf32>
    %234 = vector.extract_strided_slice %230 {offsets = [0, 0], sizes = [8, 128], strides = [1, 1]} : vector<8x384xf32> to vector<8x128xf32>
    %235 = vector.extract_strided_slice %233 {offsets = [0, 0], sizes = [8, 128], strides = [1, 1]} : vector<8x384xf32> to vector<8x128xf32>
    %236 = arith.addf %234, %235 : vector<8x128xf32>
    %237 = arith.negf %236 : vector<8x128xf32>
    %238 = math.exp %237 : vector<8x128xf32>
    %cst_73 = arith.constant 1.000000e+00 : f32
    %239 = vector.broadcast %cst_73 : f32 to vector<8x128xf32>
    %240 = arith.addf %239, %238 : vector<8x128xf32>
    %241 = arith.divf %239, %240 : vector<8x128xf32>
    %242 = vector.extract_strided_slice %230 {offsets = [0, 128], sizes = [8, 128], strides = [1, 1]} : vector<8x384xf32> to vector<8x128xf32>
    %243 = vector.extract_strided_slice %233 {offsets = [0, 128], sizes = [8, 128], strides = [1, 1]} : vector<8x384xf32> to vector<8x128xf32>
    %244 = arith.addf %242, %243 : vector<8x128xf32>
    %245 = arith.negf %244 : vector<8x128xf32>
    %246 = math.exp %245 : vector<8x128xf32>
    %cst_74 = arith.constant 1.000000e+00 : f32
    %247 = vector.broadcast %cst_74 : f32 to vector<8x128xf32>
    %248 = arith.addf %247, %246 : vector<8x128xf32>
    %249 = arith.divf %247, %248 : vector<8x128xf32>
    %250 = vector.extract_strided_slice %230 {offsets = [0, 256], sizes = [8, 128], strides = [1, 1]} : vector<8x384xf32> to vector<8x128xf32>
    %251 = vector.extract_strided_slice %233 {offsets = [0, 256], sizes = [8, 128], strides = [1, 1]} : vector<8x384xf32> to vector<8x128xf32>
    %252 = arith.addf %251, %42 : vector<8x128xf32>
    %253 = arith.mulf %241, %252 : vector<8x128xf32>
    %254 = arith.addf %250, %253 : vector<8x128xf32>
    %255 = math.tanh %254 : vector<8x128xf32>
    %cst_75 = arith.constant 1.000000e+00 : f32
    %256 = vector.broadcast %cst_75 : f32 to vector<8x128xf32>
    %257 = arith.subf %256, %249 : vector<8x128xf32>
    %258 = arith.mulf %257, %255 : vector<8x128xf32>
    %259 = arith.mulf %249, %229 : vector<8x128xf32>
    %260 = arith.addf %258, %259 : vector<8x128xf32>
    %c56_76 = arith.constant 56 : index
    %c0_77 = arith.constant 0 : index
    %261 = vector.load %arg12[%c56_76, %c0_77] : memref<64x384xf32, #tpu.memory_space<vmem>>, vector<8x384xf32>
    %262 = arith.truncf %260 : vector<8x128xf32> to vector<8x128xbf16>
    %c0_78 = arith.constant 0 : index
    %c0_79 = arith.constant 0 : index
    %263 = vector.load %arg2[%c0_78, %c0_79] : memref<128x384xbf16, #tpu.memory_space<vmem>>, vector<128x384xbf16>
    %cst_80 = arith.constant dense<0.000000e+00> : vector<8x384xf32>
    %264 = tpu.matmul %262, %263, %cst_80 {dimension_numbers = #tpu.dot_dimension_numbers<[1], [0], [0], [1], [0, 0, 1, 1], [], []>} : vector<8x128xbf16>, vector<128x384xbf16>, vector<8x384xf32> -> vector<8x384xf32>
    %265 = vector.extract_strided_slice %261 {offsets = [0, 0], sizes = [8, 128], strides = [1, 1]} : vector<8x384xf32> to vector<8x128xf32>
    %266 = vector.extract_strided_slice %264 {offsets = [0, 0], sizes = [8, 128], strides = [1, 1]} : vector<8x384xf32> to vector<8x128xf32>
    %267 = arith.addf %265, %266 : vector<8x128xf32>
    %268 = arith.negf %267 : vector<8x128xf32>
    %269 = math.exp %268 : vector<8x128xf32>
    %cst_81 = arith.constant 1.000000e+00 : f32
    %270 = vector.broadcast %cst_81 : f32 to vector<8x128xf32>
    %271 = arith.addf %270, %269 : vector<8x128xf32>
    %272 = arith.divf %270, %271 : vector<8x128xf32>
    %273 = vector.extract_strided_slice %261 {offsets = [0, 128], sizes = [8, 128], strides = [1, 1]} : vector<8x384xf32> to vector<8x128xf32>
    %274 = vector.extract_strided_slice %264 {offsets = [0, 128], sizes = [8, 128], strides = [1, 1]} : vector<8x384xf32> to vector<8x128xf32>
    %275 = arith.addf %273, %274 : vector<8x128xf32>
    %276 = arith.negf %275 : vector<8x128xf32>
    %277 = math.exp %276 : vector<8x128xf32>
    %cst_82 = arith.constant 1.000000e+00 : f32
    %278 = vector.broadcast %cst_82 : f32 to vector<8x128xf32>
    %279 = arith.addf %278, %277 : vector<8x128xf32>
    %280 = arith.divf %278, %279 : vector<8x128xf32>
    %281 = vector.extract_strided_slice %261 {offsets = [0, 256], sizes = [8, 128], strides = [1, 1]} : vector<8x384xf32> to vector<8x128xf32>
    %282 = vector.extract_strided_slice %264 {offsets = [0, 256], sizes = [8, 128], strides = [1, 1]} : vector<8x384xf32> to vector<8x128xf32>
    %283 = arith.addf %282, %42 : vector<8x128xf32>
    %284 = arith.mulf %272, %283 : vector<8x128xf32>
    %285 = arith.addf %281, %284 : vector<8x128xf32>
    %286 = math.tanh %285 : vector<8x128xf32>
    %cst_83 = arith.constant 1.000000e+00 : f32
    %287 = vector.broadcast %cst_83 : f32 to vector<8x128xf32>
    %288 = arith.subf %287, %280 : vector<8x128xf32>
    %289 = arith.mulf %288, %286 : vector<8x128xf32>
    %290 = arith.mulf %280, %260 : vector<8x128xf32>
    %291 = arith.addf %289, %290 : vector<8x128xf32>
    %292 = arith.truncf %291 : vector<8x128xf32> to vector<8x128xbf16>
    %c0_84 = arith.constant 0 : index
    %c0_85 = arith.constant 0 : index
    %293 = vector.load %arg8[%c0_84, %c0_85] : memref<128x128xbf16, #tpu.memory_space<vmem>>, vector<128x128xbf16>
    %cst_86 = arith.constant dense<0.000000e+00> : vector<8x128xf32>
    %294 = tpu.matmul %292, %293, %cst_86 {dimension_numbers = #tpu.dot_dimension_numbers<[1], [0], [0], [1], [0, 0, 1, 1], [], []>} : vector<8x128xbf16>, vector<128x128xbf16>, vector<8x128xf32> -> vector<8x128xf32>
    %295 = arith.addf %39, %294 : vector<8x128xf32>
    %c0_87 = arith.constant 0 : index
    %c0_88 = arith.constant 0 : index
    %296 = vector.load %arg11[%c0_87, %c0_88] : memref<8x128xf32, #tpu.memory_space<vmem>>, vector<8x128xf32>
    tpu.vector_store %arg11[%c0_87, %c0_88], %295 {strides = array<i32>} : memref<8x128xf32, #tpu.memory_space<vmem>>, vector<8x128xf32>,
    return
  }
}

</mosaic_0001>

<llo_original>
// kernel: tpu_custom_call.1
$region0: #{tpu_custom_call.1}
  #allocation0 [shape = 'u32[]', space=smem, size = 0x4, offset = 0x4, fixed_abs, tag = 'smem constant byte address 0x4 - core index']
  #allocation1 [shape = 'u32[72,128]{1,0:T(1,128)}', space=vmem, size = 0x9000, scoped, tag = 'internal scratch']
  #allocation2 [shape = 'f32[64,384]{1,0:T(8,128)}', space=vmem, size = 0x18000, scoped, tag = 'scratch operand']
  %s0 = inlined_call_operand.vmem [shape: bf16[64,16], index: 0, kind: input, shape index: {}]
  %s1 = inlined_call_operand.vmem [shape: bf16[16,384], index: 1, kind: input, shape index: {}]
  %s2 = inlined_call_operand.hbm [shape: bf16[128,384], index: 2, kind: input, shape index: {}]
  %s3 = inlined_call_operand.vmem [shape: f32[1,384], index: 3, kind: input, shape index: {}]
  %s4 = inlined_call_operand.vmem [shape: f32[1,128], index: 4, kind: input, shape index: {}]
  %s5 = inlined_call_operand.hbm [shape: bf16[16,384], index: 5, kind: input, shape index: {}]
  %s6 = inlined_call_operand.vmem [shape: f32[1,384], index: 6, kind: input, shape index: {}]
  %s7 = inlined_call_operand.vmem [shape: f32[1,128], index: 7, kind: input, shape index: {}]
  %s8 = inlined_call_operand.hbm [shape: bf16[128,128], index: 8, kind: input, shape index: {}]
  %s9 = inlined_call_operand.hbm [shape: bf16[128,128], index: 9, kind: input, shape index: {}]
  %s10 = inlined_call_operand.vmem [shape: f32[1,128], index: 10, kind: input, shape index: {}]
  %s11 = inlined_call_operand.hbm [shape: f32[8,128], index: 11, kind: output, shape index: {}]
  %s12 = sld [smem:[#allocation0]]
  $region70: #{tpu_custom_call.1} parent=0
    _
  %s14 = ssub.s32 1, %s12
  %s15 = scalar_select 0, %s14, %s12
  $region1: #{tpu_custom_call.1} parent=0
    #allocation3 [shape = 'u8[98304]{0}', space=vmem, size = 0x18000, scoped, tag = 'input window, operand 2, single buffered']
    #allocation4 [shape = 's32[1]{0}', space=sflag, size = 0x4, scoped, tag = 'scoped memory for tpu_custom_call.1']
    #allocation5 [shape = 's32[1]{0}', space=sflag, size = 0x4, scoped, tag = 'scoped memory for tpu_custom_call.1']
    #allocation6 [shape = 'u8[12288]{0}', space=vmem, size = 0x3000, scoped, tag = 'input window, operand 5, single buffered']
    #allocation7 [shape = 's32[1]{0}', space=sflag, size = 0x4, scoped, tag = 'scoped memory for tpu_custom_call.1']
    #allocation8 [shape = 'u8[32768]{0}', space=vmem, size = 0x8000, scoped, tag = 'input window, operand 8, single buffered']
    #allocation9 [shape = 'u8[32768]{0}', space=vmem, size = 0x8000, scoped, tag = 'input window, operand 9, single buffered']
    #allocation10 [shape = 's32[1]{0}', space=sflag, size = 0x4, scoped, tag = 'scoped memory for tpu_custom_call.1']
    #allocation11 [shape = 'u8[4096]{0}', space=vmem, size = 0x1000, scoped, tag = 'output window, operand 0, single buffered']
    %16 = vsyncpa [#allocation4], 0
    %17 = vsyncpa [#allocation7], 0
    %18 = vsyncpa [#allocation10], 0
    %19 = vsyncpa [#allocation5], 0
    // Predicated region
    $region2: #{tpu_custom_call.1} parent=1 // pred_check
      _
    $region3: #{tpu_custom_call.1} parent=1 // pred_check_branch
      %21 = sbr.rel (0) target = $region5
    $region4: #{tpu_custom_call.1} parent=1 // pred_region
      _
    $region5: #{tpu_custom_call.1} parent=1 // pred_fallthru
      _
    // Predicated region
    $region6: #{tpu_custom_call.1} parent=1 // pred_check
      _
    $region7: #{tpu_custom_call.1} parent=1 // pred_check_branch
      %23 = sbr.rel (0) target = $region9
    $region8: #{tpu_custom_call.1} parent=1 // pred_region
      _
    $region9: #{tpu_custom_call.1} parent=1 // pred_fallthru
      _
    // Predicated region
    $region10: #{tpu_custom_call.1} parent=1 // pred_check
      _
    $region11: #{tpu_custom_call.1} parent=1 // pred_check_branch
      %25 = sbr.rel (0) target = $region13
    $region12: #{tpu_custom_call.1} parent=1 // pred_region
      %27 = vsyncadd [#allocation4], 0
      %s28 = sshll.u32 %s2, 4
      %s29 = int_to_ptr.hbm [resolvable:$true] %s28
      %s30 = sshll.u32 [#allocation3], 4
      %s31 = int_to_ptr.vmem [resolvable:$true] %s30
      %36 = dma.hbm_to_vmem [thread:$0]  %s29, 3072, %s31, [#allocation4], 192, 192, 12
    $region13: #{tpu_custom_call.1} parent=1 // pred_fallthru
      _
    // Predicated region
    $region14: #{tpu_custom_call.1} parent=1 // pred_check
      _
    $region15: #{tpu_custom_call.1} parent=1 // pred_check_branch
      %38 = sbr.rel (0) target = $region17
    $region16: #{tpu_custom_call.1} parent=1 // pred_region
      _
    $region17: #{tpu_custom_call.1} parent=1 // pred_fallthru
      _
    // Predicated region
    $region18: #{tpu_custom_call.1} parent=1 // pred_check
      _
    $region19: #{tpu_custom_call.1} parent=1 // pred_check_branch
      %40 = sbr.rel (0) target = $region21
    $region20: #{tpu_custom_call.1} parent=1 // pred_region
      _
    $region21: #{tpu_custom_call.1} parent=1 // pred_fallthru
      _
    // Predicated region
    $region22: #{tpu_custom_call.1} parent=1 // pred_check
      _
    $region23: #{tpu_custom_call.1} parent=1 // pred_check_branch
      %42 = sbr.rel (0) target = $region25
    $region24: #{tpu_custom_call.1} parent=1 // pred_region
      %44 = vsyncadd [#allocation7], 0
      %s45 = sshll.u32 %s5, 4
      %s46 = int_to_ptr.hbm [resolvable:$true] %s45
      %s47 = sshll.u32 [#allocation6], 4
      %s48 = int_to_ptr.vmem [resolvable:$true] %s47
      %53 = dma.hbm_to_vmem [thread:$0]  %s46, 384, %s48, [#allocation7], 192, 192, 12
    $region25: #{tpu_custom_call.1} parent=1 // pred_fallthru
      _
    // Predicated region
    $region26: #{tpu_custom_call.1} parent=1 // pred_check
      _
    $region27: #{tpu_custom_call.1} parent=1 // pred_check_branch
      %55 = sbr.rel (0) target = $region29
    $region28: #{tpu_custom_call.1} parent=1 // pred_region
      _
    $region29: #{tpu_custom_call.1} parent=1 // pred_fallthru
      _
    // Predicated region
    $region30: #{tpu_custom_call.1} parent=1 // pred_check
      _
    $region31: #{tpu_custom_call.1} parent=1 // pred_check_branch
      %57 = sbr.rel (0) target = $region33
    $region32: #{tpu_custom_call.1} parent=1 // pred_region
      _
    $region33: #{tpu_custom_call.1} parent=1 // pred_fallthru
      _
    // Predicated region
    $region34: #{tpu_custom_call.1} parent=1 // pred_check
      _
    $region35: #{tpu_custom_call.1} parent=1 // pred_check_branch
      %59 = sbr.rel (0) target = $region37
    $region36: #{tpu_custom_call.1} parent=1 // pred_region
      %61 = vsyncadd [#allocation7], 0
      %s62 = sshll.u32 %s8, 4
      %s63 = int_to_ptr.hbm [resolvable:$true] %s62
      %s64 = sshll.u32 [#allocation8], 4
      %s65 = int_to_ptr.vmem [resolvable:$true] %s64
      %70 = dma.hbm_to_vmem [thread:$0]  %s63, 1024, %s65, [#allocation7], 64, 64, 4
    $region37: #{tpu_custom_call.1} parent=1 // pred_fallthru
      _
    // Predicated region
    $region38: #{tpu_custom_call.1} parent=1 // pred_check
      _
    $region39: #{tpu_custom_call.1} parent=1 // pred_check_branch
      %72 = sbr.rel (0) target = $region41
    $region40: #{tpu_custom_call.1} parent=1 // pred_region
      %74 = vsyncadd [#allocation10], 0
      %s75 = sshll.u32 %s9, 4
      %s76 = int_to_ptr.hbm [resolvable:$true] %s75
      %s77 = sshll.u32 [#allocation9], 4
      %s78 = int_to_ptr.vmem [resolvable:$true] %s77
      %83 = dma.hbm_to_vmem [thread:$0]  %s76, 1024, %s78, [#allocation10], 64, 64, 4
    $region41: #{tpu_custom_call.1} parent=1 // pred_fallthru
      _
    // Predicated region
    $region42: #{tpu_custom_call.1} parent=1 // pred_check
      _
    $region43: #{tpu_custom_call.1} parent=1 // pred_check_branch
      %85 = sbr.rel (0) target = $region45
    $region44: #{tpu_custom_call.1} parent=1 // pred_region
      _
    $region45: #{tpu_custom_call.1} parent=1 // pred_fallthru
      _
    // Predicated region
    $region46: #{tpu_custom_call.1} parent=1 // pred_check
      _
    $region47: #{tpu_custom_call.1} parent=1 // pred_check_branch
      %87 = sbr.rel (0) target = $region49
    $region48: #{tpu_custom_call.1} parent=1 // pred_region
      %89 = dma.done [#allocation4], 3072
    $region49: #{tpu_custom_call.1} parent=1 // pred_fallthru
      _
    // Predicated region
    $region50: #{tpu_custom_call.1} parent=1 // pred_check
      _
    $region51: #{tpu_custom_call.1} parent=1 // pred_check_branch
      %91 = sbr.rel (0) target = $region53
    $region52: #{tpu_custom_call.1} parent=1 // pred_region
      %93 = dma.done [#allocation7], 384
    $region53: #{tpu_custom_call.1} parent=1 // pred_fallthru
      _
    // Predicated region
    $region54: #{tpu_custom_call.1} parent=1 // pred_check
      _
    $region55: #{tpu_custom_call.1} parent=1 // pred_check_branch
      %95 = sbr.rel (0) target = $region57
    $region56: #{tpu_custom_call.1} parent=1 // pred_region
      %97 = dma.done [#allocation7], 1024
    $region57: #{tpu_custom_call.1} parent=1 // pred_fallthru
      _
    // Predicated region
    $region58: #{tpu_custom_call.1} parent=1 // pred_check
      _
    $region59: #{tpu_custom_call.1} parent=1 // pred_check_branch
      %99 = sbr.rel (0) target = $region61
    $region60: #{tpu_custom_call.1} parent=1 // pred_region
      %101 = dma.done [#allocation10], 1024
    $region61: #{tpu_custom_call.1} parent=1 // pred_fallthru
      _
    %v103 = vld [vmem:[%s0] sm:$0xf]
    %v104 = vld [vmem:[%s0 + $0x4] sm:$0xf]
    %v105 = vld [vmem:[%s0 + $0x8] sm:$0xf]
    %v106 = vld [vmem:[%s0 + $0xc] sm:$0xf]
    %v107 = vld [vmem:[%s0 + $0x10] sm:$0xf]
    %v108 = vld [vmem:[%s0 + $0x14] sm:$0xf]
    %v109 = vld [vmem:[%s0 + $0x18] sm:$0xf]
    %v110 = vld [vmem:[%s0 + $0x1c] sm:$0xf]
    %v111 = vld [vmem:[%s1] sm:$0xff]
    %v112 = vld [vmem:[%s1 + $0x8] sm:$0xf]
    %v113 = vld [vmem:[%s1 + $0xc] sm:$0xff]
    %v114 = vld [vmem:[%s1 + $0x14] sm:$0xf]
    %v115 = vld [vmem:[%s3] sm:$0x7]
    %v117 = vperm.slane %v115, 0
    %v118 = vperm.slane %v115, 1
    %v119 = vperm.slane %v115, 2
    %v131 = vunpack.c.l.b16 %v103
    %v132 = vunpack.c.l.b16 %v104
    %v133 = vunpack.c.l.b16 %v105
    %v134 = vunpack.c.l.b16 %v106
    %v135 = vunpack.c.l.b16 %v107
    %v136 = vunpack.c.l.b16 %v108
    %v137 = vunpack.c.l.b16 %v109
    %v138 = vunpack.c.l.b16 %v110
    %v139 = vpack.c.b16 %v132, %v131
    %v140 = vpack.c.b16 %v134, %v133
    %v141 = vpack.c.b16 %v136, %v135
    %v142 = vpack.c.b16 %v138, %v137
    %v147 = vunpack.c.l.b16 %v111
    %v148 = vunpack.c.h.b16 %v111
    %v149 = vunpack.c.l.b16 %v112
    %v150 = vunpack.c.l.b16 %v113
    %v151 = vunpack.c.h.b16 %v113
    %v152 = vunpack.c.l.b16 %v114
    %v153 = vpack.c.b16 %v150, %v147
    %v154 = vpack.c.b16 %v151, %v148
    %v155 = vpack.c.b16 %v152, %v149
    %vm159 = vcmask 130048
    %v161 = vsel %vm159, %v139, 0
    %v164 = vsel %vm159, %v140, 0
    %v167 = vsel %vm159, %v141, 0
    %v170 = vsel %vm159, %v142, 0
    %172 = vmatpush.bf16.msra.mxu0 0
    %173 = vmatpush.bf16.msra.mxu0 0
    %174 = vmatpush.bf16.msra.mxu0 0
    %175 = vmatpush.bf16.msra.mxu0 0
    %176 = vmatpush.bf16.msra.mxu0 0
    %177 = vmatpush.bf16.msra.mxu0 0
    %178 = vmatpush.bf16.msra.mxu0 0
    %179 = vmatpush.bf16.msra.mxu0 %v153
    %180 = vmatmul.bf16.gmra.mxu0 %v161
    %v181 = vpop.f32.mrf.mxu0
    %v182 = vadd.f32 %v117, %v181
    %v183 = vpop.f32.mrf.mxu0
    %v184 = vadd.f32 %v117, %v183
    %185 = vmatmul.bf16.gmra.mxu0 %v164
    %v186 = vpop.f32.mrf.mxu0
    %v187 = vadd.f32 %v117, %v186
    %v188 = vpop.f32.mrf.mxu0
    %v189 = vadd.f32 %v117, %v188
    %190 = vmatmul.bf16.gmra.mxu0 %v167
    %v191 = vpop.f32.mrf.mxu0
    %v192 = vadd.f32 %v117, %v191
    %v193 = vpop.f32.mrf.mxu0
    %v194 = vadd.f32 %v117, %v193
    %195 = vmatmul.bf16.gmra.mxu0 %v170
    %v196 = vpop.f32.mrf.mxu0
    %v197 = vadd.f32 %v117, %v196
    %v198 = vpop.f32.mrf.mxu0
    %v199 = vadd.f32 %v117, %v198
    %200 = vdwg.mxu0
    %201 = vmatpush.bf16.msra.mxu0 0
    %202 = vmatpush.bf16.msra.mxu0 0
    %203 = vmatpush.bf16.msra.mxu0 0
    %204 = vmatpush.bf16.msra.mxu0 0
    %205 = vmatpush.bf16.msra.mxu0 0
    %206 = vmatpush.bf16.msra.mxu0 0
    %207 = vmatpush.bf16.msra.mxu0 0
    %208 = vmatpush.bf16.msra.mxu0 %v154
    %209 = vmatmul.bf16.gmra.mxu0 %v161
    %v210 = vpop.f32.mrf.mxu0
    %v211 = vadd.f32 %v118, %v210
    %v212 = vpop.f32.mrf.mxu0
    %v213 = vadd.f32 %v118, %v212
    %214 = vmatmul.bf16.gmra.mxu0 %v164
    %v215 = vpop.f32.mrf.mxu0
    %v216 = vadd.f32 %v118, %v215
    %v217 = vpop.f32.mrf.mxu0
    %v218 = vadd.f32 %v118, %v217
    %219 = vmatmul.bf16.gmra.mxu0 %v167
    %v220 = vpop.f32.mrf.mxu0
    %v221 = vadd.f32 %v118, %v220
    %v222 = vpop.f32.mrf.mxu0
    %v223 = vadd.f32 %v118, %v222
    %224 = vmatmul.bf16.gmra.mxu0 %v170
    %v225 = vpop.f32.mrf.mxu0
    %v226 = vadd.f32 %v118, %v225
    %v227 = vpop.f32.mrf.mxu0
    %v228 = vadd.f32 %v118, %v227
    %229 = vdwg.mxu0
    %230 = vmatpush.bf16.msra.mxu0 0
    %231 = vmatpush.bf16.msra.mxu0 0
    %232 = vmatpush.bf16.msra.mxu0 0
    %233 = vmatpush.bf16.msra.mxu0 0
    %234 = vmatpush.bf16.msra.mxu0 0
    %235 = vmatpush.bf16.msra.mxu0 0
    %236 = vmatpush.bf16.msra.mxu0 0
    %237 = vmatpush.bf16.msra.mxu0 %v155
    %238 = vmatmul.bf16.gmra.mxu0 %v161
    %v239 = vpop.f32.mrf.mxu0
    %v240 = vadd.f32 %v119, %v239
    %v241 = vpop.f32.mrf.mxu0
    %v242 = vadd.f32 %v119, %v241
    %243 = vmatmul.bf16.gmra.mxu0 %v164
    %v244 = vpop.f32.mrf.mxu0
    %v245 = vadd.f32 %v119, %v244
    %v246 = vpop.f32.mrf.mxu0
    %v247 = vadd.f32 %v119, %v246
    %248 = vmatmul.bf16.gmra.mxu0 %v167
    %v249 = vpop.f32.mrf.mxu0
    %v250 = vadd.f32 %v119, %v249
    %v251 = vpop.f32.mrf.mxu0
    %v252 = vadd.f32 %v119, %v251
    %253 = vmatmul.bf16.gmra.mxu0 %v170
    %v254 = vpop.f32.mrf.mxu0
    %v255 = vadd.f32 %v119, %v254
    %v256 = vpop.f32.mrf.mxu0
    %v257 = vadd.f32 %v119, %v256
    %258 = vdwg.mxu0
    %259 = vst [vmem:[#allocation2] sm:$0xff] %v182
    %260 = vst [vmem:[#allocation2 + $0x8] sm:$0xff] %v211
    %261 = vst [vmem:[#allocation2 + $0x10] sm:$0xff] %v240
    %262 = vst [vmem:[#allocation2 + $0x18] sm:$0xff] %v184
    %263 = vst [vmem:[#allocation2 + $0x20] sm:$0xff] %v213
    %264 = vst [vmem:[#allocation2 + $0x28] sm:$0xff] %v242
    %265 = vst [vmem:[#allocation2 + $0x30] sm:$0xff] %v187
    %266 = vst [vmem:[#allocation2 + $0x38] sm:$0xff] %v216
    %267 = vst [vmem:[#allocation2 + $0x40] sm:$0xff] %v245
    %268 = vst [vmem:[#allocation2 + $0x48] sm:$0xff] %v189
    %269 = vst [vmem:[#allocation2 + $0x50] sm:$0xff] %v218
    %270 = vst [vmem:[#allocation2 + $0x58] sm:$0xff] %v247
    %271 = vst [vmem:[#allocation2 + $0x60] sm:$0xff] %v192
    %272 = vst [vmem:[#allocation2 + $0x68] sm:$0xff] %v221
    %273 = vst [vmem:[#allocation2 + $0x70] sm:$0xff] %v250
    %274 = vst [vmem:[#allocation2 + $0x78] sm:$0xff] %v194
    %275 = vst [vmem:[#allocation2 + $0x80] sm:$0xff] %v223
    %276 = vst [vmem:[#allocation2 + $0x88] sm:$0xff] %v252
    %277 = vst [vmem:[#allocation2 + $0x90] sm:$0xff] %v197
    %278 = vst [vmem:[#allocation2 + $0x98] sm:$0xff] %v226
    %279 = vst [vmem:[#allocation2 + $0xa0] sm:$0xff] %v255
    %280 = vst [vmem:[#allocation2 + $0xa8] sm:$0xff] %v199
    %281 = vst [vmem:[#allocation2 + $0xb0] sm:$0xff] %v228
    %282 = vst [vmem:[#allocation2 + $0xb8] sm:$0xff] %v257
    %v283 = vld [vmem:[%s0 + $0x1c] sm:$0xf]
    %v284 = vld [vmem:[#allocation6] sm:$0xff]
    %v285 = vld [vmem:[#allocation6 + $0x8] sm:$0xf]
    %v286 = vld [vmem:[#allocation6 + $0xc] sm:$0xff]
    %v287 = vld [vmem:[#allocation6 + $0x14] sm:$0xf]
    %v288 = vld [vmem:[%s6] sm:$0x7]
    %v290 = vperm.slane %v288, 0
    %v291 = vperm.slane %v288, 1
    %v292 = vperm.slane %v288, 2
    %v300 = vunpack.c.l.b16 %v284
    %v301 = vunpack.c.h.b16 %v284
    %v302 = vunpack.c.l.b16 %v285
    %v303 = vunpack.c.l.b16 %v286
    %v304 = vunpack.c.h.b16 %v286
    %v305 = vunpack.c.l.b16 %v287
    %v306 = vpack.c.b16 %v303, %v300
    %v307 = vpack.c.b16 %v304, %v301
    %v308 = vpack.c.b16 %v305, %v302
    %v313 = vsel %vm159, %v283, 0
    %315 = vmatpush.bf16.msra.mxu0 0
    %316 = vmatpush.bf16.msra.mxu0 0
    %317 = vmatpush.bf16.msra.mxu0 0
    %318 = vmatpush.bf16.msra.mxu0 0
    %319 = vmatpush.bf16.msra.mxu0 0
    %320 = vmatpush.bf16.msra.mxu0 0
    %321 = vmatpush.bf16.msra.mxu0 0
    %322 = vmatpush.bf16.msra.mxu0 %v306
    %323 = vmatmul.bf16.gmra.mxu0 %v313
    %v324 = vpop.f32.mrf.mxu0
    %v325 = vadd.f32 %v290, %v324
    %v326 = vpop.f32.mrf.mxu0
    %327 = vdwg.mxu0
    %328 = vmatpush.bf16.msra.mxu0 0
    %329 = vmatpush.bf16.msra.mxu0 0
    %330 = vmatpush.bf16.msra.mxu0 0
    %331 = vmatpush.bf16.msra.mxu0 0
    %332 = vmatpush.bf16.msra.mxu0 0
    %333 = vmatpush.bf16.msra.mxu0 0
    %334 = vmatpush.bf16.msra.mxu0 0
    %335 = vmatpush.bf16.msra.mxu0 %v307
    %336 = vmatmul.bf16.gmra.mxu0 %v313
    %v337 = vpop.f32.mrf.mxu0
    %v338 = vadd.f32 %v291, %v337
    %v339 = vpop.f32.mrf.mxu0
    %340 = vdwg.mxu0
    %341 = vmatpush.bf16.msra.mxu0 0
    %342 = vmatpush.bf16.msra.mxu0 0
    %343 = vmatpush.bf16.msra.mxu0 0
    %344 = vmatpush.bf16.msra.mxu0 0
    %345 = vmatpush.bf16.msra.mxu0 0
    %346 = vmatpush.bf16.msra.mxu0 0
    %347 = vmatpush.bf16.msra.mxu0 0
    %348 = vmatpush.bf16.msra.mxu0 %v308
    %349 = vmatmul.bf16.gmra.mxu0 %v313
    %v350 = vpop.f32.mrf.mxu0
    %v351 = vadd.f32 %v292, %v350
    %v352 = vpop.f32.mrf.mxu0
    %353 = vdwg.mxu0
    %v354 = vxor.u32 %v325, 2147483648
    %v355 = vmul.f32 %v354, 1.442695
    %v356 = vpow.pop %v355
    %v357 = vadd.f32 %v356, 1.0
    %v358 = vrcp.pop %v357
    %v359 = vmul.f32 %v357, %v358
    %v360 = vsub.f32 1.0, %v359
    %v361 = vmul.f32 %v358, %v360
    %v362 = vadd.f32 %v358, %v361
    %vm363 = vweird.f32 %v357
    %vm364 = vweird.f32 %v358
    %vm365 = vmor %vm363, %vm364
    %v366 = vsel %vm365, %v358, %v362
    %v367 = vand.u32 2147483647, %v357
    %vm368 = vcmp.eq.f32.partialorder %v367, 8.507059e+37
    %v369 = vand.u32 %v357, 2147483648
    %v370 = vor.u32 1.1754944e-38, %v369
    %v371 = vsel %vm368, %v370, %v366
    %v372 = vmul.f32 1.0, %v371
    %v373 = vxor.u32 %v338, 2147483648
    %v374 = vmul.f32 %v373, 1.442695
    %v375 = vpow.pop %v374
    %v376 = vadd.f32 %v375, 1.0
    %v377 = vrcp.pop %v376
    %v378 = vmul.f32 %v376, %v377
    %v379 = vsub.f32 1.0, %v378
    %v380 = vmul.f32 %v377, %v379
    %v381 = vadd.f32 %v377, %v380
    %vm382 = vweird.f32 %v376
    %vm383 = vweird.f32 %v377
    %vm384 = vmor %vm382, %vm383
    %v385 = vsel %vm384, %v377, %v381
    %v386 = vand.u32 2147483647, %v376
    %vm387 = vcmp.eq.f32.partialorder %v386, 8.507059e+37
    %v388 = vand.u32 %v376, 2147483648
    %v389 = vor.u32 1.1754944e-38, %v388
    %v390 = vsel %vm387, %v389, %v385
    %v391 = vmul.f32 1.0, %v390
    %v392 = vld [vmem:[%s7] sm:$0x1]
    %v394 = vperm.slane %v392, 0
    %v396 = vmul.f32 %v372, %v394
    %v397 = vadd.f32 %v351, %v396
    %v398 = vtanh.pop %v397
    %v399 = vsub.f32 1.0, %v391
    %v400 = vmul.f32 %v399, %v398
    %v401 = vpack.c.bf16 %v400, %v400
    %v402 = vld [vmem:[#allocation9] sm:$0xf]
    %v403 = vld [vmem:[#allocation9 + $0x4] sm:$0xf]
    %v404 = vld [vmem:[#allocation9 + $0x8] sm:$0xf]
    %v405 = vld [vmem:[#allocation9 + $0xc] sm:$0xf]
    %v406 = vld [vmem:[#allocation9 + $0x10] sm:$0xf]
    %v407 = vld [vmem:[#allocation9 + $0x14] sm:$0xf]
    %v408 = vld [vmem:[#allocation9 + $0x18] sm:$0xf]
    %v409 = vld [vmem:[#allocation9 + $0x1c] sm:$0xf]
    %v410 = vld [vmem:[#allocation9 + $0x20] sm:$0xf]
    %v411 = vld [vmem:[#allocation9 + $0x24] sm:$0xf]
    %v412 = vld [vmem:[#allocation9 + $0x28] sm:$0xf]
    %v413 = vld [vmem:[#allocation9 + $0x2c] sm:$0xf]
    %v414 = vld [vmem:[#allocation9 + $0x30] sm:$0xf]
    %v415 = vld [vmem:[#allocation9 + $0x34] sm:$0xf]
    %v416 = vld [vmem:[#allocation9 + $0x38] sm:$0xf]
    %v417 = vld [vmem:[#allocation9 + $0x3c] sm:$0xf]
    %v418 = vld [vmem:[%s10] sm:$0x1]
    %v420 = vperm.slane %v418, 0
    %v438 = vunpack.c.l.b16 %v402
    %v439 = vunpack.c.l.b16 %v403
    %v440 = vunpack.c.l.b16 %v404
    %v441 = vunpack.c.l.b16 %v405
    %v442 = vunpack.c.l.b16 %v406
    %v443 = vunpack.c.l.b16 %v407
    %v444 = vunpack.c.l.b16 %v408
    %v445 = vunpack.c.l.b16 %v409
    %v446 = vunpack.c.l.b16 %v410
    %v447 = vunpack.c.l.b16 %v411
    %v448 = vunpack.c.l.b16 %v412
    %v449 = vunpack.c.l.b16 %v413
    %v450 = vunpack.c.l.b16 %v414
    %v451 = vunpack.c.l.b16 %v415
    %v452 = vunpack.c.l.b16 %v416
    %v453 = vunpack.c.l.b16 %v417
    %v454 = vpack.c.b16 %v439, %v438
    %v455 = vpack.c.b16 %v441, %v440
    %v456 = vpack.c.b16 %v443, %v442
    %v457 = vpack.c.b16 %v445, %v444
    %v458 = vpack.c.b16 %v447, %v446
    %v459 = vpack.c.b16 %v449, %v448
    %v460 = vpack.c.b16 %v451, %v450
    %v461 = vpack.c.b16 %v453, %v452
    %470 = vmatpush.bf16.msra.mxu0 %v461
    %471 = vmatpush.bf16.msra.mxu0 %v460
    %472 = vmatpush.bf16.msra.mxu0 %v459
    %473 = vmatpush.bf16.msra.mxu0 %v458
    %474 = vmatpush.bf16.msra.mxu0 %v457
    %475 = vmatpush.bf16.msra.mxu0 %v456
    %476 = vmatpush.bf16.msra.mxu0 %v455
    %477 = vmatpush.bf16.msra.mxu0 %v454
    %478 = vmatmul.bf16.gmra.mxu0 %v401
    %v479 = vpop.f32.mrf.mxu0
    %v480 = vadd.f32 %v420, %v479
    %v481 = vpop.f32.mrf.mxu0
    %482 = vdwg.mxu0
    %v483 = vld [vmem:[%s4] sm:$0x1]
    %v485 = vperm.slane %v483, 0
    %v487 = vld [vmem:[#allocation2] sm:$0xff]
    %v488 = vld [vmem:[#allocation2 + $0x8] sm:$0xff]
    %v489 = vld [vmem:[#allocation2 + $0x10] sm:$0xff]
    %v490 = vld [vmem:[#allocation3] sm:$0xff]
    %v491 = vld [vmem:[#allocation3 + $0x8] sm:$0xf]
    %v492 = vld [vmem:[#allocation3 + $0xc] sm:$0xff]
    %v493 = vld [vmem:[#allocation3 + $0x14] sm:$0xf]
    %v494 = vld [vmem:[#allocation3 + $0x18] sm:$0xff]
    %v495 = vld [vmem:[#allocation3 + $0x20] sm:$0xf]
    %v496 = vld [vmem:[#allocation3 + $0x24] sm:$0xff]
    %v497 = vld [vmem:[#allocation3 + $0x2c] sm:$0xf]
    %v498 = vld [vmem:[#allocation3 + $0x30] sm:$0xff]
    %v499 = vld [vmem:[#allocation3 + $0x38] sm:$0xf]
    %v500 = vld [vmem:[#allocation3 + $0x3c] sm:$0xff]
    %v501 = vld [vmem:[#allocation3 + $0x44] sm:$0xf]
    %v502 = vld [vmem:[#allocation3 + $0x48] sm:$0xff]
    %v503 = vld [vmem:[#allocation3 + $0x50] sm:$0xf]
    %v504 = vld [vmem:[#allocation3 + $0x54] sm:$0xff]
    %v505 = vld [vmem:[#allocation3 + $0x5c] sm:$0xf]
    %v506 = vld [vmem:[#allocation3 + $0x60] sm:$0xff]
    %v507 = vld [vmem:[#allocation3 + $0x68] sm:$0xf]
    %v508 = vld [vmem:[#allocation3 + $0x6c] sm:$0xff]
    %v509 = vld [vmem:[#allocation3 + $0x74] sm:$0xf]
    %v510 = vld [vmem:[#allocation3 + $0x78] sm:$0xff]
    %v511 = vld [vmem:[#allocation3 + $0x80] sm:$0xf]
    %v512 = vld [vmem:[#allocation3 + $0x84] sm:$0xff]
    %v513 = vld [vmem:[#allocation3 + $0x8c] sm:$0xf]
    %v514 = vld [vmem:[#allocation3 + $0x90] sm:$0xff]
    %v515 = vld [vmem:[#allocation3 + $0x98] sm:$0xf]
    %v516 = vld [vmem:[#allocation3 + $0x9c] sm:$0xff]
    %v517 = vld [vmem:[#allocation3 + $0xa4] sm:$0xf]
    %v518 = vld [vmem:[#allocation3 + $0xa8] sm:$0xff]
    %v519 = vld [vmem:[#allocation3 + $0xb0] sm:$0xf]
    %v520 = vld [vmem:[#allocation3 + $0xb4] sm:$0xff]
    %v521 = vld [vmem:[#allocation3 + $0xbc] sm:$0xf]
    %v554 = vunpack.c.l.b16 %v490
    %v555 = vunpack.c.h.b16 %v490
    %v556 = vunpack.c.l.b16 %v491
    %v557 = vunpack.c.l.b16 %v492
    %v558 = vunpack.c.h.b16 %v492
    %v559 = vunpack.c.l.b16 %v493
    %v560 = vunpack.c.l.b16 %v494
    %v561 = vunpack.c.h.b16 %v494
    %v562 = vunpack.c.l.b16 %v495
    %v563 = vunpack.c.l.b16 %v496
    %v564 = vunpack.c.h.b16 %v496
    %v565 = vunpack.c.l.b16 %v497
    %v566 = vunpack.c.l.b16 %v498
    %v567 = vunpack.c.h.b16 %v498
    %v568 = vunpack.c.l.b16 %v499
    %v569 = vunpack.c.l.b16 %v500
    %v570 = vunpack.c.h.b16 %v500
    %v571 = vunpack.c.l.b16 %v501
    %v572 = vunpack.c.l.b16 %v502
    %v573 = vunpack.c.h.b16 %v502
    %v574 = vunpack.c.l.b16 %v503
    %v575 = vunpack.c.l.b16 %v504
    %v576 = vunpack.c.h.b16 %v504
    %v577 = vunpack.c.l.b16 %v505
    %v578 = vunpack.c.l.b16 %v506
    %v579 = vunpack.c.h.b16 %v506
    %v580 = vunpack.c.l.b16 %v507
    %v581 = vunpack.c.l.b16 %v508
    %v582 = vunpack.c.h.b16 %v508
    %v583 = vunpack.c.l.b16 %v509
    %v584 = vunpack.c.l.b16 %v510
    %v585 = vunpack.c.h.b16 %v510
    %v586 = vunpack.c.l.b16 %v511
    %v587 = vunpack.c.l.b16 %v512
    %v588 = vunpack.c.h.b16 %v512
    %v589 = vunpack.c.l.b16 %v513
    %v590 = vunpack.c.l.b16 %v514
    %v591 = vunpack.c.h.b16 %v514
    %v592 = vunpack.c.l.b16 %v515
    %v593 = vunpack.c.l.b16 %v516
    %v594 = vunpack.c.h.b16 %v516
    %v595 = vunpack.c.l.b16 %v517
    %v596 = vunpack.c.l.b16 %v518
    %v597 = vunpack.c.h.b16 %v518
    %v598 = vunpack.c.l.b16 %v519
    %v599 = vunpack.c.l.b16 %v520
    %v600 = vunpack.c.h.b16 %v520
    %v601 = vunpack.c.l.b16 %v521
    %v602 = vpack.c.b16 %v557, %v554
    %v603 = vpack.c.b16 %v558, %v555
    %v604 = vpack.c.b16 %v559, %v556
    %v605 = vpack.c.b16 %v563, %v560
    %v606 = vpack.c.b16 %v564, %v561
    %v607 = vpack.c.b16 %v565, %v562
    %v608 = vpack.c.b16 %v569, %v566
    %v609 = vpack.c.b16 %v570, %v567
    %v610 = vpack.c.b16 %v571, %v568
    %v611 = vpack.c.b16 %v575, %v572
    %v612 = vpack.c.b16 %v576, %v573
    %v613 = vpack.c.b16 %v577, %v574
    %v614 = vpack.c.b16 %v581, %v578
    %v615 = vpack.c.b16 %v582, %v579
    %v616 = vpack.c.b16 %v583, %v580
    %v617 = vpack.c.b16 %v587, %v584
    %v618 = vpack.c.b16 %v588, %v585
    %v619 = vpack.c.b16 %v589, %v586
    %v620 = vpack.c.b16 %v593, %v590
    %v621 = vpack.c.b16 %v594, %v591
    %v622 = vpack.c.b16 %v595, %v592
    %v623 = vpack.c.b16 %v599, %v596
    %v624 = vpack.c.b16 %v600, %v597
    %v625 = vpack.c.b16 %v601, %v598
    %650 = vmatpush.bf16.msra.mxu0 %v623
    %651 = vmatpush.bf16.msra.mxu0 %v620
    %652 = vmatpush.bf16.msra.mxu0 %v617
    %653 = vmatpush.bf16.msra.mxu0 %v614
    %654 = vmatpush.bf16.msra.mxu0 %v611
    %655 = vmatpush.bf16.msra.mxu0 %v608
    %656 = vmatpush.bf16.msra.mxu0 %v605
    %657 = vmatpush.bf16.msra.mxu0 %v602
    %658 = vmatmul.bf16.gmra.mxu0 0
    %v659 = vpop.f32.mrf.mxu0
    %v660 = vadd.f32 0.0, %v659
    %v661 = vpop.f32.mrf.mxu0
    %662 = vdwg.mxu0
    %663 = vmatpush.bf16.msra.mxu0 %v624
    %664 = vmatpush.bf16.msra.mxu0 %v621
    %665 = vmatpush.bf16.msra.mxu0 %v618
    %666 = vmatpush.bf16.msra.mxu0 %v615
    %667 = vmatpush.bf16.msra.mxu0 %v612
    %668 = vmatpush.bf16.msra.mxu0 %v609
    %669 = vmatpush.bf16.msra.mxu0 %v606
    %670 = vmatpush.bf16.msra.mxu0 %v603
    %671 = vmatmul.bf16.gmra.mxu0 0
    %v672 = vpop.f32.mrf.mxu0
    %v673 = vadd.f32 0.0, %v672
    %v674 = vpop.f32.mrf.mxu0
    %675 = vdwg.mxu0
    %676 = vmatpush.bf16.msra.mxu0 %v625
    %677 = vmatpush.bf16.msra.mxu0 %v622
    %678 = vmatpush.bf16.msra.mxu0 %v619
    %679 = vmatpush.bf16.msra.mxu0 %v616
    %680 = vmatpush.bf16.msra.mxu0 %v613
    %681 = vmatpush.bf16.msra.mxu0 %v610
    %682 = vmatpush.bf16.msra.mxu0 %v607
    %683 = vmatpush.bf16.msra.mxu0 %v604
    %684 = vmatmul.bf16.gmra.mxu0 0
    %v685 = vpop.f32.mrf.mxu0
    %v686 = vadd.f32 0.0, %v685
    %v687 = vpop.f32.mrf.mxu0
    %688 = vdwg.mxu0
    %v689 = vadd.f32 %v487, %v660
    %v690 = vxor.u32 %v689, 2147483648
    %v691 = vmul.f32 %v690, 1.442695
    %v692 = vpow.pop %v691
    %v693 = vadd.f32 %v692, 1.0
    %v694 = vrcp.pop %v693
    %v695 = vmul.f32 %v693, %v694
    %v696 = vsub.f32 1.0, %v695
    %v697 = vmul.f32 %v694, %v696
    %v698 = vadd.f32 %v694, %v697
    %vm699 = vweird.f32 %v693
    %vm700 = vweird.f32 %v694
    %vm701 = vmor %vm699, %vm700
    %v702 = vsel %vm701, %v694, %v698
    %v703 = vand.u32 2147483647, %v693
    %vm704 = vcmp.eq.f32.partialorder %v703, 8.507059e+37
    %v705 = vand.u32 %v693, 2147483648
    %v706 = vor.u32 1.1754944e-38, %v705
    %v707 = vsel %vm704, %v706, %v702
    %v708 = vmul.f32 1.0, %v707
    %v709 = vadd.f32 %v488, %v673
    %v710 = vxor.u32 %v709, 2147483648
    %v711 = vmul.f32 %v710, 1.442695
    %v712 = vpow.pop %v711
    %v713 = vadd.f32 %v712, 1.0
    %v714 = vrcp.pop %v713
    %v715 = vmul.f32 %v713, %v714
    %v716 = vsub.f32 1.0, %v715
    %v717 = vmul.f32 %v714, %v716
    %v718 = vadd.f32 %v714, %v717
    %vm719 = vweird.f32 %v713
    %vm720 = vweird.f32 %v714
    %vm721 = vmor %vm719, %vm720
    %v722 = vsel %vm721, %v714, %v718
    %v723 = vand.u32 2147483647, %v713
    %vm724 = vcmp.eq.f32.partialorder %v723, 8.507059e+37
    %v725 = vand.u32 %v713, 2147483648
    %v726 = vor.u32 1.1754944e-38, %v725
    %v727 = vsel %vm724, %v726, %v722
    %v728 = vmul.f32 1.0, %v727
    %v729 = vadd.f32 %v686, %v485
    %v730 = vmul.f32 %v708, %v729
    %v731 = vadd.f32 %v489, %v730
    %v732 = vtanh.pop %v731
    %v733 = vsub.f32 1.0, %v728
    %v734 = vmul.f32 %v733, %v732
    %v735 = vmul.f32 %v728, 0.0
    %v736 = vadd.f32 %v734, %v735
    %v737 = vld [vmem:[#allocation2 + $0x18] sm:$0xff]
    %v738 = vld [vmem:[#allocation2 + $0x20] sm:$0xff]
    %v739 = vld [vmem:[#allocation2 + $0x28] sm:$0xff]
    %v740 = vpack.c.bf16 %v736, %v736
    %741 = vmatpush.bf16.msra.mxu0 %v623
    %742 = vmatpush.bf16.msra.mxu0 %v620
    %743 = vmatpush.bf16.msra.mxu0 %v617
    %744 = vmatpush.bf16.msra.mxu0 %v614
    %745 = vmatpush.bf16.msra.mxu0 %v611
    %746 = vmatpush.bf16.msra.mxu0 %v608
    %747 = vmatpush.bf16.msra.mxu0 %v605
    %748 = vmatpush.bf16.msra.mxu0 %v602
    %749 = vmatmul.bf16.gmra.mxu0 %v740
    %v750 = vpop.f32.mrf.mxu0
    %v751 = vadd.f32 0.0, %v750
    %v752 = vpop.f32.mrf.mxu0
    %753 = vdwg.mxu0
    %754 = vmatpush.bf16.msra.mxu0 %v624
    %755 = vmatpush.bf16.msra.mxu0 %v621
    %756 = vmatpush.bf16.msra.mxu0 %v618
    %757 = vmatpush.bf16.msra.mxu0 %v615
    %758 = vmatpush.bf16.msra.mxu0 %v612
    %759 = vmatpush.bf16.msra.mxu0 %v609
    %760 = vmatpush.bf16.msra.mxu0 %v606
    %761 = vmatpush.bf16.msra.mxu0 %v603
    %762 = vmatmul.bf16.gmra.mxu0 %v740
    %v763 = vpop.f32.mrf.mxu0
    %v764 = vadd.f32 0.0, %v763
    %v765 = vpop.f32.mrf.mxu0
    %766 = vdwg.mxu0
    %767 = vmatpush.bf16.msra.mxu0 %v625
    %768 = vmatpush.bf16.msra.mxu0 %v622
    %769 = vmatpush.bf16.msra.mxu0 %v619
    %770 = vmatpush.bf16.msra.mxu0 %v616
    %771 = vmatpush.bf16.msra.mxu0 %v613
    %772 = vmatpush.bf16.msra.mxu0 %v610
    %773 = vmatpush.bf16.msra.mxu0 %v607
    %774 = vmatpush.bf16.msra.mxu0 %v604
    %775 = vmatmul.bf16.gmra.mxu0 %v740
    %v776 = vpop.f32.mrf.mxu0
    %v777 = vadd.f32 0.0, %v776
    %v778 = vpop.f32.mrf.mxu0
    %779 = vdwg.mxu0
    %v780 = vadd.f32 %v737, %v751
    %v781 = vxor.u32 %v780, 2147483648
    %v782 = vmul.f32 %v781, 1.442695
    %v783 = vpow.pop %v782
    %v784 = vadd.f32 %v783, 1.0
    %v785 = vrcp.pop %v784
    %v786 = vmul.f32 %v784, %v785
    %v787 = vsub.f32 1.0, %v786
    %v788 = vmul.f32 %v785, %v787
    %v789 = vadd.f32 %v785, %v788
    %vm790 = vweird.f32 %v784
    %vm791 = vweird.f32 %v785
    %vm792 = vmor %vm790, %vm791
    %v793 = vsel %vm792, %v785, %v789
    %v794 = vand.u32 2147483647, %v784
    %vm795 = vcmp.eq.f32.partialorder %v794, 8.507059e+37
    %v796 = vand.u32 %v784, 2147483648
    %v797 = vor.u32 1.1754944e-38, %v796
    %v798 = vsel %vm795, %v797, %v793
    %v799 = vmul.f32 1.0, %v798
    %v800 = vadd.f32 %v738, %v764
    %v801 = vxor.u32 %v800, 2147483648
    %v802 = vmul.f32 %v801, 1.442695
    %v803 = vpow.pop %v802
    %v804 = vadd.f32 %v803, 1.0
    %v805 = vrcp.pop %v804
    %v806 = vmul.f32 %v804, %v805
    %v807 = vsub.f32 1.0, %v806
    %v808 = vmul.f32 %v805, %v807
    %v809 = vadd.f32 %v805, %v808
    %vm810 = vweird.f32 %v804
    %vm811 = vweird.f32 %v805
    %vm812 = vmor %vm810, %vm811
    %v813 = vsel %vm812, %v805, %v809
    %v814 = vand.u32 2147483647, %v804
    %vm815 = vcmp.eq.f32.partialorder %v814, 8.507059e+37
    %v816 = vand.u32 %v804, 2147483648
    %v817 = vor.u32 1.1754944e-38, %v816
    %v818 = vsel %vm815, %v817, %v813
    %v819 = vmul.f32 1.0, %v818
    %v820 = vadd.f32 %v777, %v485
    %v821 = vmul.f32 %v799, %v820
    %v822 = vadd.f32 %v739, %v821
    %v823 = vtanh.pop %v822
    %v824 = vsub.f32 1.0, %v819
    %v825 = vmul.f32 %v824, %v823
    %v826 = vmul.f32 %v819, %v736
    %v827 = vadd.f32 %v825, %v826
    %v828 = vld [vmem:[#allocation2 + $0x30] sm:$0xff]
    %v829 = vld [vmem:[#allocation2 + $0x38] sm:$0xff]
    %v830 = vld [vmem:[#allocation2 + $0x40] sm:$0xff]
    %v831 = vpack.c.bf16 %v827, %v827
    %832 = vmatpush.bf16.msra.mxu0 %v623
    %833 = vmatpush.bf16.msra.mxu0 %v620
    %834 = vmatpush.bf16.msra.mxu0 %v617
    %835 = vmatpush.bf16.msra.mxu0 %v614
    %836 = vmatpush.bf16.msra.mxu0 %v611
    %837 = vmatpush.bf16.msra.mxu0 %v608
    %838 = vmatpush.bf16.msra.mxu0 %v605
    %839 = vmatpush.bf16.msra.mxu0 %v602
    %840 = vmatmul.bf16.gmra.mxu0 %v831
    %v841 = vpop.f32.mrf.mxu0
    %v842 = vadd.f32 0.0, %v841
    %v843 = vpop.f32.mrf.mxu0
    %844 = vdwg.mxu0
    %845 = vmatpush.bf16.msra.mxu0 %v624
    %846 = vmatpush.bf16.msra.mxu0 %v621
    %847 = vmatpush.bf16.msra.mxu0 %v618
    %848 = vmatpush.bf16.msra.mxu0 %v615
    %849 = vmatpush.bf16.msra.mxu0 %v612
    %850 = vmatpush.bf16.msra.mxu0 %v609
    %851 = vmatpush.bf16.msra.mxu0 %v606
    %852 = vmatpush.bf16.msra.mxu0 %v603
    %853 = vmatmul.bf16.gmra.mxu0 %v831
    %v854 = vpop.f32.mrf.mxu0
    %v855 = vadd.f32 0.0, %v854
    %v856 = vpop.f32.mrf.mxu0
    %857 = vdwg.mxu0
    %858 = vmatpush.bf16.msra.mxu0 %v625
    %859 = vmatpush.bf16.msra.mxu0 %v622
    %860 = vmatpush.bf16.msra.mxu0 %v619
    %861 = vmatpush.bf16.msra.mxu0 %v616
    %862 = vmatpush.bf16.msra.mxu0 %v613
    %863 = vmatpush.bf16.msra.mxu0 %v610
    %864 = vmatpush.bf16.msra.mxu0 %v607
    %865 = vmatpush.bf16.msra.mxu0 %v604
    %866 = vmatmul.bf16.gmra.mxu0 %v831
    %v867 = vpop.f32.mrf.mxu0
    %v868 = vadd.f32 0.0, %v867
    %v869 = vpop.f32.mrf.mxu0
    %870 = vdwg.mxu0
    %v871 = vadd.f32 %v828, %v842
    %v872 = vxor.u32 %v871, 2147483648
    %v873 = vmul.f32 %v872, 1.442695
    %v874 = vpow.pop %v873
    %v875 = vadd.f32 %v874, 1.0
    %v876 = vrcp.pop %v875
    %v877 = vmul.f32 %v875, %v876
    %v878 = vsub.f32 1.0, %v877
    %v879 = vmul.f32 %v876, %v878
    %v880 = vadd.f32 %v876, %v879
    %vm881 = vweird.f32 %v875
    %vm882 = vweird.f32 %v876
    %vm883 = vmor %vm881, %vm882
    %v884 = vsel %vm883, %v876, %v880
    %v885 = vand.u32 2147483647, %v875
    %vm886 = vcmp.eq.f32.partialorder %v885, 8.507059e+37
    %v887 = vand.u32 %v875, 2147483648
    %v888 = vor.u32 1.1754944e-38, %v887
    %v889 = vsel %vm886, %v888, %v884
    %v890 = vmul.f32 1.0, %v889
    %v891 = vadd.f32 %v829, %v855
    %v892 = vxor.u32 %v891, 2147483648
    %v893 = vmul.f32 %v892, 1.442695
    %v894 = vpow.pop %v893
    %v895 = vadd.f32 %v894, 1.0
    %v896 = vrcp.pop %v895
    %v897 = vmul.f32 %v895, %v896
    %v898 = vsub.f32 1.0, %v897
    %v899 = vmul.f32 %v896, %v898
    %v900 = vadd.f32 %v896, %v899
    %vm901 = vweird.f32 %v895
    %vm902 = vweird.f32 %v896
    %vm903 = vmor %vm901, %vm902
    %v904 = vsel %vm903, %v896, %v900
    %v905 = vand.u32 2147483647, %v895
    %vm906 = vcmp.eq.f32.partialorder %v905, 8.507059e+37
    %v907 = vand.u32 %v895, 2147483648
    %v908 = vor.u32 1.1754944e-38, %v907
    %v909 = vsel %vm906, %v908, %v904
    %v910 = vmul.f32 1.0, %v909
    %v911 = vadd.f32 %v868, %v485
    %v912 = vmul.f32 %v890, %v911
    %v913 = vadd.f32 %v830, %v912
    %v914 = vtanh.pop %v913
    %v915 = vsub.f32 1.0, %v910
    %v916 = vmul.f32 %v915, %v914
    %v917 = vmul.f32 %v910, %v827
    %v918 = vadd.f32 %v916, %v917
    %v919 = vld [vmem:[#allocation2 + $0x48] sm:$0xff]
    %v920 = vld [vmem:[#allocation2 + $0x50] sm:$0xff]
    %v921 = vld [vmem:[#allocation2 + $0x58] sm:$0xff]
    %v922 = vpack.c.bf16 %v918, %v918
    %923 = vmatpush.bf16.msra.mxu0 %v623
    %924 = vmatpush.bf16.msra.mxu0 %v620
    %925 = vmatpush.bf16.msra.mxu0 %v617
    %926 = vmatpush.bf16.msra.mxu0 %v614
    %927 = vmatpush.bf16.msra.mxu0 %v611
    %928 = vmatpush.bf16.msra.mxu0 %v608
    %929 = vmatpush.bf16.msra.mxu0 %v605
    %930 = vmatpush.bf16.msra.mxu0 %v602
    %931 = vmatmul.bf16.gmra.mxu0 %v922
    %v932 = vpop.f32.mrf.mxu0
    %v933 = vadd.f32 0.0, %v932
    %v934 = vpop.f32.mrf.mxu0
    %935 = vdwg.mxu0
    %936 = vmatpush.bf16.msra.mxu0 %v624
    %937 = vmatpush.bf16.msra.mxu0 %v621
    %938 = vmatpush.bf16.msra.mxu0 %v618
    %939 = vmatpush.bf16.msra.mxu0 %v615
    %940 = vmatpush.bf16.msra.mxu0 %v612
    %941 = vmatpush.bf16.msra.mxu0 %v609
    %942 = vmatpush.bf16.msra.mxu0 %v606
    %943 = vmatpush.bf16.msra.mxu0 %v603
    %944 = vmatmul.bf16.gmra.mxu0 %v922
    %v945 = vpop.f32.mrf.mxu0
    %v946 = vadd.f32 0.0, %v945
    %v947 = vpop.f32.mrf.mxu0
    %948 = vdwg.mxu0
    %949 = vmatpush.bf16.msra.mxu0 %v625
    %950 = vmatpush.bf16.msra.mxu0 %v622
    %951 = vmatpush.bf16.msra.mxu0 %v619
    %952 = vmatpush.bf16.msra.mxu0 %v616
    %953 = vmatpush.bf16.msra.mxu0 %v613
    %954 = vmatpush.bf16.msra.mxu0 %v610
    %955 = vmatpush.bf16.msra.mxu0 %v607
    %956 = vmatpush.bf16.msra.mxu0 %v604
    %957 = vmatmul.bf16.gmra.mxu0 %v922
    %v958 = vpop.f32.mrf.mxu0
    %v959 = vadd.f32 0.0, %v958
    %v960 = vpop.f32.mrf.mxu0
    %961 = vdwg.mxu0
    %v962 = vadd.f32 %v919, %v933
    %v963 = vxor.u32 %v962, 2147483648
    %v964 = vmul.f32 %v963, 1.442695
    %v965 = vpow.pop %v964
    %v966 = vadd.f32 %v965, 1.0
    %v967 = vrcp.pop %v966
    %v968 = vmul.f32 %v966, %v967
    %v969 = vsub.f32 1.0, %v968
    %v970 = vmul.f32 %v967, %v969
    %v971 = vadd.f32 %v967, %v970
    %vm972 = vweird.f32 %v966
    %vm973 = vweird.f32 %v967
    %vm974 = vmor %vm972, %vm973
    %v975 = vsel %vm974, %v967, %v971
    %v976 = vand.u32 2147483647, %v966
    %vm977 = vcmp.eq.f32.partialorder %v976, 8.507059e+37
    %v978 = vand.u32 %v966, 2147483648
    %v979 = vor.u32 1.1754944e-38, %v978
    %v980 = vsel %vm977, %v979, %v975
    %v981 = vmul.f32 1.0, %v980
    %v982 = vadd.f32 %v920, %v946
    %v983 = vxor.u32 %v982, 2147483648
    %v984 = vmul.f32 %v983, 1.442695
    %v985 = vpow.pop %v984
    %v986 = vadd.f32 %v985, 1.0
    %v987 = vrcp.pop %v986
    %v988 = vmul.f32 %v986, %v987
    %v989 = vsub.f32 1.0, %v988
    %v990 = vmul.f32 %v987, %v989
    %v991 = vadd.f32 %v987, %v990
    %vm992 = vweird.f32 %v986
    %vm993 = vweird.f32 %v987
    %vm994 = vmor %vm992, %vm993
    %v995 = vsel %vm994, %v987, %v991
    %v996 = vand.u32 2147483647, %v986
    %vm997 = vcmp.eq.f32.partialorder %v996, 8.507059e+37
    %v998 = vand.u32 %v986, 2147483648
    %v999 = vor.u32 1.1754944e-38, %v998
    %v1000 = vsel %vm997, %v999, %v995
    %v1001 = vmul.f32 1.0, %v1000
    %v1002 = vadd.f32 %v959, %v485
    %v1003 = vmul.f32 %v981, %v1002
    %v1004 = vadd.f32 %v921, %v1003
    %v1005 = vtanh.pop %v1004
    %v1006 = vsub.f32 1.0, %v1001
    %v1007 = vmul.f32 %v1006, %v1005
    %v1008 = vmul.f32 %v1001, %v918
    %v1009 = vadd.f32 %v1007, %v1008
    %v1010 = vld [vmem:[#allocation2 + $0x60] sm:$0xff]
    %v1011 = vld [vmem:[#allocation2 + $0x68] sm:$0xff]
    %v1012 = vld [vmem:[#allocation2 + $0x70] sm:$0xff]
    %v1013 = vpack.c.bf16 %v1009, %v1009
    %1014 = vmatpush.bf16.msra.mxu0 %v623
    %1015 = vmatpush.bf16.msra.mxu0 %v620
    %1016 = vmatpush.bf16.msra.mxu0 %v617
    %1017 = vmatpush.bf16.msra.mxu0 %v614
    %1018 = vmatpush.bf16.msra.mxu0 %v611
    %1019 = vmatpush.bf16.msra.mxu0 %v608
    %1020 = vmatpush.bf16.msra.mxu0 %v605
    %1021 = vmatpush.bf16.msra.mxu0 %v602
    %1022 = vmatmul.bf16.gmra.mxu0 %v1013
    %v1023 = vpop.f32.mrf.mxu0
    %v1024 = vadd.f32 0.0, %v1023
    %v1025 = vpop.f32.mrf.mxu0
    %1026 = vdwg.mxu0
    %1027 = vmatpush.bf16.msra.mxu0 %v624
    %1028 = vmatpush.bf16.msra.mxu0 %v621
    %1029 = vmatpush.bf16.msra.mxu0 %v618
    %1030 = vmatpush.bf16.msra.mxu0 %v615
    %1031 = vmatpush.bf16.msra.mxu0 %v612
    %1032 = vmatpush.bf16.msra.mxu0 %v609
    %1033 = vmatpush.bf16.msra.mxu0 %v606
    %1034 = vmatpush.bf16.msra.mxu0 %v603
    %1035 = vmatmul.bf16.gmra.mxu0 %v1013
    %v1036 = vpop.f32.mrf.mxu0
    %v1037 = vadd.f32 0.0, %v1036
    %v1038 = vpop.f32.mrf.mxu0
    %1039 = vdwg.mxu0
    %1040 = vmatpush.bf16.msra.mxu0 %v625
    %1041 = vmatpush.bf16.msra.mxu0 %v622
    %1042 = vmatpush.bf16.msra.mxu0 %v619
    %1043 = vmatpush.bf16.msra.mxu0 %v616
    %1044 = vmatpush.bf16.msra.mxu0 %v613
    %1045 = vmatpush.bf16.msra.mxu0 %v610
    %1046 = vmatpush.bf16.msra.mxu0 %v607
    %1047 = vmatpush.bf16.msra.mxu0 %v604
    %1048 = vmatmul.bf16.gmra.mxu0 %v1013
    %v1049 = vpop.f32.mrf.mxu0
    %v1050 = vadd.f32 0.0, %v1049
    %v1051 = vpop.f32.mrf.mxu0
    %1052 = vdwg.mxu0
    %v1053 = vadd.f32 %v1010, %v1024
    %v1054 = vxor.u32 %v1053, 2147483648
    %v1055 = vmul.f32 %v1054, 1.442695
    %v1056 = vpow.pop %v1055
    %v1057 = vadd.f32 %v1056, 1.0
    %v1058 = vrcp.pop %v1057
    %v1059 = vmul.f32 %v1057, %v1058
    %v1060 = vsub.f32 1.0, %v1059
    %v1061 = vmul.f32 %v1058, %v1060
    %v1062 = vadd.f32 %v1058, %v1061
    %vm1063 = vweird.f32 %v1057
    %vm1064 = vweird.f32 %v1058
    %vm1065 = vmor %vm1063, %vm1064
    %v1066 = vsel %vm1065, %v1058, %v1062
    %v1067 = vand.u32 2147483647, %v1057
    %vm1068 = vcmp.eq.f32.partialorder %v1067, 8.507059e+37
    %v1069 = vand.u32 %v1057, 2147483648
    %v1070 = vor.u32 1.1754944e-38, %v1069
    %v1071 = vsel %vm1068, %v1070, %v1066
    %v1072 = vmul.f32 1.0, %v1071
    %v1073 = vadd.f32 %v1011, %v1037
    %v1074 = vxor.u32 %v1073, 2147483648
    %v1075 = vmul.f32 %v1074, 1.442695
    %v1076 = vpow.pop %v1075
    %v1077 = vadd.f32 %v1076, 1.0
    %v1078 = vrcp.pop %v1077
    %v1079 = vmul.f32 %v1077, %v1078
    %v1080 = vsub.f32 1.0, %v1079
    %v1081 = vmul.f32 %v1078, %v1080
    %v1082 = vadd.f32 %v1078, %v1081
    %vm1083 = vweird.f32 %v1077
    %vm1084 = vweird.f32 %v1078
    %vm1085 = vmor %vm1083, %vm1084
    %v1086 = vsel %vm1085, %v1078, %v1082
    %v1087 = vand.u32 2147483647, %v1077
    %vm1088 = vcmp.eq.f32.partialorder %v1087, 8.507059e+37
    %v1089 = vand.u32 %v1077, 2147483648
    %v1090 = vor.u32 1.1754944e-38, %v1089
    %v1091 = vsel %vm1088, %v1090, %v1086
    %v1092 = vmul.f32 1.0, %v1091
    %v1093 = vadd.f32 %v1050, %v485
    %v1094 = vmul.f32 %v1072, %v1093
    %v1095 = vadd.f32 %v1012, %v1094
    %v1096 = vtanh.pop %v1095
    %v1097 = vsub.f32 1.0, %v1092
    %v1098 = vmul.f32 %v1097, %v1096
    %v1099 = vmul.f32 %v1092, %v1009
    %v1100 = vadd.f32 %v1098, %v1099
    %v1101 = vld [vmem:[#allocation2 + $0x78] sm:$0xff]
    %v1102 = vld [vmem:[#allocation2 + $0x80] sm:$0xff]
    %v1103 = vld [vmem:[#allocation2 + $0x88] sm:$0xff]
    %v1104 = vpack.c.bf16 %v1100, %v1100
    %1105 = vmatpush.bf16.msra.mxu0 %v623
    %1106 = vmatpush.bf16.msra.mxu0 %v620
    %1107 = vmatpush.bf16.msra.mxu0 %v617
    %1108 = vmatpush.bf16.msra.mxu0 %v614
    %1109 = vmatpush.bf16.msra.mxu0 %v611
    %1110 = vmatpush.bf16.msra.mxu0 %v608
    %1111 = vmatpush.bf16.msra.mxu0 %v605
    %1112 = vmatpush.bf16.msra.mxu0 %v602
    %1113 = vmatmul.bf16.gmra.mxu0 %v1104
    %v1114 = vpop.f32.mrf.mxu0
    %v1115 = vadd.f32 0.0, %v1114
    %v1116 = vpop.f32.mrf.mxu0
    %1117 = vdwg.mxu0
    %1118 = vmatpush.bf16.msra.mxu0 %v624
    %1119 = vmatpush.bf16.msra.mxu0 %v621
    %1120 = vmatpush.bf16.msra.mxu0 %v618
    %1121 = vmatpush.bf16.msra.mxu0 %v615
    %1122 = vmatpush.bf16.msra.mxu0 %v612
    %1123 = vmatpush.bf16.msra.mxu0 %v609
    %1124 = vmatpush.bf16.msra.mxu0 %v606
    %1125 = vmatpush.bf16.msra.mxu0 %v603
    %1126 = vmatmul.bf16.gmra.mxu0 %v1104
    %v1127 = vpop.f32.mrf.mxu0
    %v1128 = vadd.f32 0.0, %v1127
    %v1129 = vpop.f32.mrf.mxu0
    %1130 = vdwg.mxu0
    %1131 = vmatpush.bf16.msra.mxu0 %v625
    %1132 = vmatpush.bf16.msra.mxu0 %v622
    %1133 = vmatpush.bf16.msra.mxu0 %v619
    %1134 = vmatpush.bf16.msra.mxu0 %v616
    %1135 = vmatpush.bf16.msra.mxu0 %v613
    %1136 = vmatpush.bf16.msra.mxu0 %v610
    %1137 = vmatpush.bf16.msra.mxu0 %v607
    %1138 = vmatpush.bf16.msra.mxu0 %v604
    %1139 = vmatmul.bf16.gmra.mxu0 %v1104
    %v1140 = vpop.f32.mrf.mxu0
    %v1141 = vadd.f32 0.0, %v1140
    %v1142 = vpop.f32.mrf.mxu0
    %1143 = vdwg.mxu0
    %v1144 = vadd.f32 %v1101, %v1115
    %v1145 = vxor.u32 %v1144, 2147483648
    %v1146 = vmul.f32 %v1145, 1.442695
    %v1147 = vpow.pop %v1146
    %v1148 = vadd.f32 %v1147, 1.0
    %v1149 = vrcp.pop %v1148
    %v1150 = vmul.f32 %v1148, %v1149
    %v1151 = vsub.f32 1.0, %v1150
    %v1152 = vmul.f32 %v1149, %v1151
    %v1153 = vadd.f32 %v1149, %v1152
    %vm1154 = vweird.f32 %v1148
    %vm1155 = vweird.f32 %v1149
    %vm1156 = vmor %vm1154, %vm1155
    %v1157 = vsel %vm1156, %v1149, %v1153
    %v1158 = vand.u32 2147483647, %v1148
    %vm1159 = vcmp.eq.f32.partialorder %v1158, 8.507059e+37
    %v1160 = vand.u32 %v1148, 2147483648
    %v1161 = vor.u32 1.1754944e-38, %v1160
    %v1162 = vsel %vm1159, %v1161, %v1157
    %v1163 = vmul.f32 1.0, %v1162
    %v1164 = vadd.f32 %v1102, %v1128
    %v1165 = vxor.u32 %v1164, 2147483648
    %v1166 = vmul.f32 %v1165, 1.442695
    %v1167 = vpow.pop %v1166
    %v1168 = vadd.f32 %v1167, 1.0
    %v1169 = vrcp.pop %v1168
    %v1170 = vmul.f32 %v1168, %v1169
    %v1171 = vsub.f32 1.0, %v1170
    %v1172 = vmul.f32 %v1169, %v1171
    %v1173 = vadd.f32 %v1169, %v1172
    %vm1174 = vweird.f32 %v1168
    %vm1175 = vweird.f32 %v1169
    %vm1176 = vmor %vm1174, %vm1175
    %v1177 = vsel %vm1176, %v1169, %v1173
    %v1178 = vand.u32 2147483647, %v1168
    %vm1179 = vcmp.eq.f32.partialorder %v1178, 8.507059e+37
    %v1180 = vand.u32 %v1168, 2147483648
    %v1181 = vor.u32 1.1754944e-38, %v1180
    %v1182 = vsel %vm1179, %v1181, %v1177
    %v1183 = vmul.f32 1.0, %v1182
    %v1184 = vadd.f32 %v1141, %v485
    %v1185 = vmul.f32 %v1163, %v1184
    %v1186 = vadd.f32 %v1103, %v1185
    %v1187 = vtanh.pop %v1186
    %v1188 = vsub.f32 1.0, %v1183
    %v1189 = vmul.f32 %v1188, %v1187
    %v1190 = vmul.f32 %v1183, %v1100
    %v1191 = vadd.f32 %v1189, %v1190
    %v1192 = vld [vmem:[#allocation2 + $0x90] sm:$0xff]
    %v1193 = vld [vmem:[#allocation2 + $0x98] sm:$0xff]
    %v1194 = vld [vmem:[#allocation2 + $0xa0] sm:$0xff]
    %v1195 = vpack.c.bf16 %v1191, %v1191
    %1196 = vmatpush.bf16.msra.mxu0 %v623
    %1197 = vmatpush.bf16.msra.mxu0 %v620
    %1198 = vmatpush.bf16.msra.mxu0 %v617
    %1199 = vmatpush.bf16.msra.mxu0 %v614
    %1200 = vmatpush.bf16.msra.mxu0 %v611
    %1201 = vmatpush.bf16.msra.mxu0 %v608
    %1202 = vmatpush.bf16.msra.mxu0 %v605
    %1203 = vmatpush.bf16.msra.mxu0 %v602
    %1204 = vmatmul.bf16.gmra.mxu0 %v1195
    %v1205 = vpop.f32.mrf.mxu0
    %v1206 = vadd.f32 0.0, %v1205
    %v1207 = vpop.f32.mrf.mxu0
    %1208 = vdwg.mxu0
    %1209 = vmatpush.bf16.msra.mxu0 %v624
    %1210 = vmatpush.bf16.msra.mxu0 %v621
    %1211 = vmatpush.bf16.msra.mxu0 %v618
    %1212 = vmatpush.bf16.msra.mxu0 %v615
    %1213 = vmatpush.bf16.msra.mxu0 %v612
    %1214 = vmatpush.bf16.msra.mxu0 %v609
    %1215 = vmatpush.bf16.msra.mxu0 %v606
    %1216 = vmatpush.bf16.msra.mxu0 %v603
    %1217 = vmatmul.bf16.gmra.mxu0 %v1195
    %v1218 = vpop.f32.mrf.mxu0
    %v1219 = vadd.f32 0.0, %v1218
    %v1220 = vpop.f32.mrf.mxu0
    %1221 = vdwg.mxu0
    %1222 = vmatpush.bf16.msra.mxu0 %v625
    %1223 = vmatpush.bf16.msra.mxu0 %v622
    %1224 = vmatpush.bf16.msra.mxu0 %v619
    %1225 = vmatpush.bf16.msra.mxu0 %v616
    %1226 = vmatpush.bf16.msra.mxu0 %v613
    %1227 = vmatpush.bf16.msra.mxu0 %v610
    %1228 = vmatpush.bf16.msra.mxu0 %v607
    %1229 = vmatpush.bf16.msra.mxu0 %v604
    %1230 = vmatmul.bf16.gmra.mxu0 %v1195
    %v1231 = vpop.f32.mrf.mxu0
    %v1232 = vadd.f32 0.0, %v1231
    %v1233 = vpop.f32.mrf.mxu0
    %1234 = vdwg.mxu0
    %v1235 = vadd.f32 %v1192, %v1206
    %v1236 = vxor.u32 %v1235, 2147483648
    %v1237 = vmul.f32 %v1236, 1.442695
    %v1238 = vpow.pop %v1237
    %v1239 = vadd.f32 %v1238, 1.0
    %v1240 = vrcp.pop %v1239
    %v1241 = vmul.f32 %v1239, %v1240
    %v1242 = vsub.f32 1.0, %v1241
    %v1243 = vmul.f32 %v1240, %v1242
    %v1244 = vadd.f32 %v1240, %v1243
    %vm1245 = vweird.f32 %v1239
    %vm1246 = vweird.f32 %v1240
    %vm1247 = vmor %vm1245, %vm1246
    %v1248 = vsel %vm1247, %v1240, %v1244
    %v1249 = vand.u32 2147483647, %v1239
    %vm1250 = vcmp.eq.f32.partialorder %v1249, 8.507059e+37
    %v1251 = vand.u32 %v1239, 2147483648
    %v1252 = vor.u32 1.1754944e-38, %v1251
    %v1253 = vsel %vm1250, %v1252, %v1248
    %v1254 = vmul.f32 1.0, %v1253
    %v1255 = vadd.f32 %v1193, %v1219
    %v1256 = vxor.u32 %v1255, 2147483648
    %v1257 = vmul.f32 %v1256, 1.442695
    %v1258 = vpow.pop %v1257
    %v1259 = vadd.f32 %v1258, 1.0
    %v1260 = vrcp.pop %v1259
    %v1261 = vmul.f32 %v1259, %v1260
    %v1262 = vsub.f32 1.0, %v1261
    %v1263 = vmul.f32 %v1260, %v1262
    %v1264 = vadd.f32 %v1260, %v1263
    %vm1265 = vweird.f32 %v1259
    %vm1266 = vweird.f32 %v1260
    %vm1267 = vmor %vm1265, %vm1266
    %v1268 = vsel %vm1267, %v1260, %v1264
    %v1269 = vand.u32 2147483647, %v1259
    %vm1270 = vcmp.eq.f32.partialorder %v1269, 8.507059e+37
    %v1271 = vand.u32 %v1259, 2147483648
    %v1272 = vor.u32 1.1754944e-38, %v1271
    %v1273 = vsel %vm1270, %v1272, %v1268
    %v1274 = vmul.f32 1.0, %v1273
    %v1275 = vadd.f32 %v1232, %v485
    %v1276 = vmul.f32 %v1254, %v1275
    %v1277 = vadd.f32 %v1194, %v1276
    %v1278 = vtanh.pop %v1277
    %v1279 = vsub.f32 1.0, %v1274
    %v1280 = vmul.f32 %v1279, %v1278
    %v1281 = vmul.f32 %v1274, %v1191
    %v1282 = vadd.f32 %v1280, %v1281
    %v1283 = vld [vmem:[#allocation2 + $0xa8] sm:$0xff]
    %v1284 = vld [vmem:[#allocation2 + $0xb0] sm:$0xff]
    %v1285 = vld [vmem:[#allocation2 + $0xb8] sm:$0xff]
    %v1286 = vpack.c.bf16 %v1282, %v1282
    %1287 = vmatpush.bf16.msra.mxu0 %v623
    %1288 = vmatpush.bf16.msra.mxu0 %v620
    %1289 = vmatpush.bf16.msra.mxu0 %v617
    %1290 = vmatpush.bf16.msra.mxu0 %v614
    %1291 = vmatpush.bf16.msra.mxu0 %v611
    %1292 = vmatpush.bf16.msra.mxu0 %v608
    %1293 = vmatpush.bf16.msra.mxu0 %v605
    %1294 = vmatpush.bf16.msra.mxu0 %v602
    %1295 = vmatmul.bf16.gmra.mxu0 %v1286
    %v1296 = vpop.f32.mrf.mxu0
    %v1297 = vadd.f32 0.0, %v1296
    %v1298 = vpop.f32.mrf.mxu0
    %1299 = vdwg.mxu0
    %1300 = vmatpush.bf16.msra.mxu0 %v624
    %1301 = vmatpush.bf16.msra.mxu0 %v621
    %1302 = vmatpush.bf16.msra.mxu0 %v618
    %1303 = vmatpush.bf16.msra.mxu0 %v615
    %1304 = vmatpush.bf16.msra.mxu0 %v612
    %1305 = vmatpush.bf16.msra.mxu0 %v609
    %1306 = vmatpush.bf16.msra.mxu0 %v606
    %1307 = vmatpush.bf16.msra.mxu0 %v603
    %1308 = vmatmul.bf16.gmra.mxu0 %v1286
    %v1309 = vpop.f32.mrf.mxu0
    %v1310 = vadd.f32 0.0, %v1309
    %v1311 = vpop.f32.mrf.mxu0
    %1312 = vdwg.mxu0
    %1313 = vmatpush.bf16.msra.mxu0 %v625
    %1314 = vmatpush.bf16.msra.mxu0 %v622
    %1315 = vmatpush.bf16.msra.mxu0 %v619
    %1316 = vmatpush.bf16.msra.mxu0 %v616
    %1317 = vmatpush.bf16.msra.mxu0 %v613
    %1318 = vmatpush.bf16.msra.mxu0 %v610
    %1319 = vmatpush.bf16.msra.mxu0 %v607
    %1320 = vmatpush.bf16.msra.mxu0 %v604
    %1321 = vmatmul.bf16.gmra.mxu0 %v1286
    %v1322 = vpop.f32.mrf.mxu0
    %v1323 = vadd.f32 0.0, %v1322
    %v1324 = vpop.f32.mrf.mxu0
    %1325 = vdwg.mxu0
    %v1326 = vadd.f32 %v1283, %v1297
    %v1327 = vxor.u32 %v1326, 2147483648
    %v1328 = vmul.f32 %v1327, 1.442695
    %v1329 = vpow.pop %v1328
    %v1330 = vadd.f32 %v1329, 1.0
    %v1331 = vrcp.pop %v1330
    %v1332 = vmul.f32 %v1330, %v1331
    %v1333 = vsub.f32 1.0, %v1332
    %v1334 = vmul.f32 %v1331, %v1333
    %v1335 = vadd.f32 %v1331, %v1334
    %vm1336 = vweird.f32 %v1330
    %vm1337 = vweird.f32 %v1331
    %vm1338 = vmor %vm1336, %vm1337
    %v1339 = vsel %vm1338, %v1331, %v1335
    %v1340 = vand.u32 2147483647, %v1330
    %vm1341 = vcmp.eq.f32.partialorder %v1340, 8.507059e+37
    %v1342 = vand.u32 %v1330, 2147483648
    %v1343 = vor.u32 1.1754944e-38, %v1342
    %v1344 = vsel %vm1341, %v1343, %v1339
    %v1345 = vmul.f32 1.0, %v1344
    %v1346 = vadd.f32 %v1284, %v1310
    %v1347 = vxor.u32 %v1346, 2147483648
    %v1348 = vmul.f32 %v1347, 1.442695
    %v1349 = vpow.pop %v1348
    %v1350 = vadd.f32 %v1349, 1.0
    %v1351 = vrcp.pop %v1350
    %v1352 = vmul.f32 %v1350, %v1351
    %v1353 = vsub.f32 1.0, %v1352
    %v1354 = vmul.f32 %v1351, %v1353
    %v1355 = vadd.f32 %v1351, %v1354
    %vm1356 = vweird.f32 %v1350
    %vm1357 = vweird.f32 %v1351
    %vm1358 = vmor %vm1356, %vm1357
    %v1359 = vsel %vm1358, %v1351, %v1355
    %v1360 = vand.u32 2147483647, %v1350
    %vm1361 = vcmp.eq.f32.partialorder %v1360, 8.507059e+37
    %v1362 = vand.u32 %v1350, 2147483648
    %v1363 = vor.u32 1.1754944e-38, %v1362
    %v1364 = vsel %vm1361, %v1363, %v1359
    %v1365 = vmul.f32 1.0, %v1364
    %v1366 = vadd.f32 %v1323, %v485
    %v1367 = vmul.f32 %v1345, %v1366
    %v1368 = vadd.f32 %v1285, %v1367
    %v1369 = vtanh.pop %v1368
    %v1370 = vsub.f32 1.0, %v1365
    %v1371 = vmul.f32 %v1370, %v1369
    %v1372 = vmul.f32 %v1365, %v1282
    %v1373 = vadd.f32 %v1371, %v1372
    %v1374 = vpack.c.bf16 %v1373, %v1373
    %v1375 = vld [vmem:[#allocation8] sm:$0xf]
    %v1376 = vld [vmem:[#allocation8 + $0x4] sm:$0xf]
    %v1377 = vld [vmem:[#allocation8 + $0x8] sm:$0xf]
    %v1378 = vld [vmem:[#allocation8 + $0xc] sm:$0xf]
    %v1379 = vld [vmem:[#allocation8 + $0x10] sm:$0xf]
    %v1380 = vld [vmem:[#allocation8 + $0x14] sm:$0xf]
    %v1381 = vld [vmem:[#allocation8 + $0x18] sm:$0xf]
    %v1382 = vld [vmem:[#allocation8 + $0x1c] sm:$0xf]
    %v1383 = vld [vmem:[#allocation8 + $0x20] sm:$0xf]
    %v1384 = vld [vmem:[#allocation8 + $0x24] sm:$0xf]
    %v1385 = vld [vmem:[#allocation8 + $0x28] sm:$0xf]
    %v1386 = vld [vmem:[#allocation8 + $0x2c] sm:$0xf]
    %v1387 = vld [vmem:[#allocation8 + $0x30] sm:$0xf]
    %v1388 = vld [vmem:[#allocation8 + $0x34] sm:$0xf]
    %v1389 = vld [vmem:[#allocation8 + $0x38] sm:$0xf]
    %v1390 = vld [vmem:[#allocation8 + $0x3c] sm:$0xf]
    %v1407 = vunpack.c.l.b16 %v1375
    %v1408 = vunpack.c.l.b16 %v1376
    %v1409 = vunpack.c.l.b16 %v1377
    %v1410 = vunpack.c.l.b16 %v1378
    %v1411 = vunpack.c.l.b16 %v1379
    %v1412 = vunpack.c.l.b16 %v1380
    %v1413 = vunpack.c.l.b16 %v1381
    %v1414 = vunpack.c.l.b16 %v1382
    %v1415 = vunpack.c.l.b16 %v1383
    %v1416 = vunpack.c.l.b16 %v1384
    %v1417 = vunpack.c.l.b16 %v1385
    %v1418 = vunpack.c.l.b16 %v1386
    %v1419 = vunpack.c.l.b16 %v1387
    %v1420 = vunpack.c.l.b16 %v1388
    %v1421 = vunpack.c.l.b16 %v1389
    %v1422 = vunpack.c.l.b16 %v1390
    %v1423 = vpack.c.b16 %v1408, %v1407
    %v1424 = vpack.c.b16 %v1410, %v1409
    %v1425 = vpack.c.b16 %v1412, %v1411
    %v1426 = vpack.c.b16 %v1414, %v1413
    %v1427 = vpack.c.b16 %v1416, %v1415
    %v1428 = vpack.c.b16 %v1418, %v1417
    %v1429 = vpack.c.b16 %v1420, %v1419
    %v1430 = vpack.c.b16 %v1422, %v1421
    %1439 = vmatpush.bf16.msra.mxu0 %v1430
    %1440 = vmatpush.bf16.msra.mxu0 %v1429
    %1441 = vmatpush.bf16.msra.mxu0 %v1428
    %1442 = vmatpush.bf16.msra.mxu0 %v1427
    %1443 = vmatpush.bf16.msra.mxu0 %v1426
    %1444 = vmatpush.bf16.msra.mxu0 %v1425
    %1445 = vmatpush.bf16.msra.mxu0 %v1424
    %1446 = vmatpush.bf16.msra.mxu0 %v1423
    %1447 = vmatmul.bf16.gmra.mxu0 %v1374
    %v1448 = vpop.f32.mrf.mxu0
    %v1449 = vadd.f32 0.0, %v1448
    %v1450 = vpop.f32.mrf.mxu0
    %1451 = vdwg.mxu0
    %v1452 = vadd.f32 %v480, %v1449
    %1453 = vst [vmem:[#allocation11] sm:$0xff] %v1452
    // Predicated region
    $region62: #{tpu_custom_call.1} parent=1 // pred_check
      _
    $region63: #{tpu_custom_call.1} parent=1 // pred_check_branch
      %1455 = sbr.rel (0) target = $region65
    $region64: #{tpu_custom_call.1} parent=1 // pred_region
      %1457 = vsyncadd [#allocation5], 0
      %s1459 = sshll.u32 [#allocation11], 4
      %s1460 = int_to_ptr.vmem [resolvable:$true] %s1459
      %s1461 = sshll.u32 %s11, 4
      %s1462 = int_to_ptr.hbm [resolvable:$true] %s1461
      %1464 = dma.vmem_to_hbm [thread:$0]  %s1460, 128, %s1462, [#allocation5]
    $region65: #{tpu_custom_call.1} parent=1 // pred_fallthru
      _
    // Predicated region
    $region66: #{tpu_custom_call.1} parent=1 // pred_check
      _
    $region67: #{tpu_custom_call.1} parent=1 // pred_check_branch
      %1466 = sbr.rel (0) target = $region69
    $region68: #{tpu_custom_call.1} parent=1 // pred_region
      %1468 = dma.done [#allocation5], 128
    $region69: #{tpu_custom_call.1} parent=1 // pred_fallthru
      _
    %1469 = vsyncpa [#allocation4], 1
    %1470 = vsyncpa [#allocation7], 1
    %1471 = vsyncpa [#allocation10], 1
    %1472 = vsyncpa [#allocation5], 1

</llo_original>
